<compile_context>
chip_gen: v7x
topology: tpu7x:2x2x1
jax: 0.10.0
libtpu: 0.0.40
codegen_flags: <defaults>
</compile_context>

<pallas_src>
import functools

import jax
import jax.numpy as jnp
from jax.experimental import pallas as pl
from jax.experimental.pallas import tpu as pltpu


def _cdiv(a, b):
    return -(-a // b)


def _round_up(a, b):
    return _cdiv(a, b) * b


# ---------------------------------------------------------------------------
# Pallas kernel: fused max-pool + squared-diff + running accumulation
# ---------------------------------------------------------------------------
def _pool_sqdiff_kernel(n_gen, true_ref, *rest):
    """One (true, gen_0..gen_{n-1}) family at a single pool level.

    true_ref / gen refs: (k2, TILE_S, 128) f32 blocks (window elems leading).
    out_ref:             (1, 1, 128)  lane-dense partial sums per parallel slice.
    acc_ref:             (TILE_S, 128) f32 running accumulator (VMEM scratch).
    """
    gen_refs = rest[:n_gen]
    out_ref = rest[n_gen]
    acc_ref = rest[n_gen + 1]

    step = pl.program_id(1)  # reduction ("arbitrary") axis

    @pl.when(step == 0)
    def _init():
        acc_ref[...] = jnp.zeros_like(acc_ref)

    def pooled(ref):
        k2 = ref.shape[0]
        p = ref[0]
        for j in range(1, k2):          # elementwise VPU maxima over window axis
            p = jnp.maximum(p, ref[j])
        return p

    pt = pooled(true_ref)               # pooled "true": computed once, reused
    acc = acc_ref[...]
    for g_ref in gen_refs:
        d = pt - pooled(g_ref)
        acc = acc + d * d               # lane-dense accumulate (pure VPU)
    acc_ref[...] = acc

    @pl.when(step == pl.num_programs(1) - 1)
    def _finalize():                    # one cross-sublane reduce + store per call
        out_ref[...] = jnp.sum(acc_ref[...], axis=0, keepdims=True)[None]


# ---------------------------------------------------------------------------
# JAX glue: nn.MaxPool2d(k, k, padding=k//2) window layout (window-major)
# ---------------------------------------------------------------------------
def _window_flat(x, k):
    """NCHW -> (k*k, M) window-major layout with -inf padding (MaxPool2d)."""
    n, c, h, w = x.shape
    x = x.astype(jnp.float32)
    if k == 1:                          # identity pool: plain reshape, no pad/transpose
        return x.reshape(1, n * c * h * w)
    p = k // 2
    out_h = (h + 2 * p - k) // k + 1
    out_w = (w + 2 * p - k) // k + 1
    hp, wp = out_h * k, out_w * k
    xp = jnp.full((n, c, hp, wp), -jnp.inf, dtype=jnp.float32)
    h_copy = min(h, hp - p)
    w_copy = min(w, wp - p)
    xp = xp.at[:, :, p:p + h_copy, p:p + w_copy].set(x[:, :, :h_copy, :w_copy])
    xr = xp.reshape(n, c, out_h, k, out_w, k).transpose(3, 5, 0, 1, 2, 4)
    return xr.reshape(k * k, n * c * out_h * out_w)
    # TODO(synk): move this -inf pad + 6-D transpose into the kernel (read raw
    # NCHW tiles once, derive all pool levels in VMEM) to cut glue HBM traffic.


def _pool_sqdiff_sum(true_x, gen_xs, k):
    """sum_g sum((maxpool_k(true) - maxpool_k(gen_g))**2) via one pallas_call."""
    k2 = k * k
    n_gen = len(gen_xs)

    flat_t = _window_flat(true_x, k)
    flat_g = [_window_flat(g, k) for g in gen_xs]
    m = flat_t.shape[1]

    # --- tile sizing: ~512 KiB per input block, (8,128)-aligned ---------------
    tile_s = max(8, (1024 // k2) // 8 * 8)           # sublanes per tile
    s_needed = _cdiv(m, 128)
    tile_s = min(tile_s, _round_up(s_needed, 8))
    n_tiles = _cdiv(s_needed, tile_s)
    ncore = 2 if n_tiles >= 2 else 1                 # expose dual-TC parallelism (v7x)
    tpc = _cdiv(n_tiles, ncore)                      # tiles per parallel slice
    s_total = ncore * tpc * tile_s

    def to_blocks(flat):
        pad = s_total * 128 - m
        if pad:                                      # zero-pad: identical in true/gen,
            flat = jnp.pad(flat, ((0, 0), (0, pad))) # pools to 0 in both -> diff 0
        return flat.reshape(k2, s_total, 128)

    in_spec = pl.BlockSpec((k2, tile_s, 128), lambda c, s: (0, c * tpc + s, 0))

    partial = pl.pallas_call(
        functools.partial(_pool_sqdiff_kernel, n_gen),
        out_shape=jax.ShapeDtypeStruct((ncore, 1, 128), jnp.float32),
        grid_spec=pltpu.PrefetchScalarGridSpec(
            num_scalar_prefetch=0,
            grid=(ncore, tpc),
            in_specs=[in_spec] * (1 + n_gen),
            out_specs=pl.BlockSpec((1, 1, 128), lambda c, s: (c, 0, 0)),
            scratch_shapes=[pltpu.VMEM((tile_s, 128), jnp.float32)],
        ),
        compiler_params=pltpu.CompilerParams(
            dimension_semantics=("parallel", "arbitrary"),
            vmem_limit_bytes=32 * 1024 * 1024,
        ),
    )(to_blocks(flat_t), *[to_blocks(f) for f in flat_g])

    return jnp.sum(partial)                          # tiny XLA reduce of (ncore,1,128)


# ---------------------------------------------------------------------------
# CustomLoss forward
# ---------------------------------------------------------------------------
@functools.partial(jax.jit, static_argnames=("pool_levels", "z_lambda"))
def custom_loss(y, z, y_snow_free, y_hat, z_hat, *, pool_levels, z_lambda):
    y_terms = jnp.zeros((), jnp.float32)   # y_snow_free_loss + y_hat_loss
    z_terms = jnp.zeros((), jnp.float32)   # z_hat_loss
    for i in range(pool_levels + 1):
        k = 2 ** i
        # pooled y computed once per level, shared by both y-branch terms
        y_terms = y_terms + _pool_sqdiff_sum(y, [y_snow_free, y_hat], k)
        z_terms = z_terms + _pool_sqdiff_sum(z, [z_hat], k)
    return y_terms + z_lambda * z_terms


# ---------------------------------------------------------------------------
# Pure-JAX reference (independent path: lax.reduce_window) for sanity check
# ---------------------------------------------------------------------------
def _ref_pool(x, k):
    if k == 1:
        return x
    n, c, h, w = x.shape
    p = k // 2
    out_h = (h + 2 * p - k) // k + 1
    out_w = (w + 2 * p - k) // k + 1
    ph_hi = out_h * k - p - h
    pw_hi = out_w * k - p - w
    if ph_hi < 0:
        x = x[:, :, : h + ph_hi, :]
        ph_hi = 0
    if pw_hi < 0:
        x = x[:, :, :, : w + pw_hi]
        pw_hi = 0
    return jax.lax.reduce_window(
        x, -jnp.inf, jax.lax.max,
        window_dimensions=(1, 1, k, k),
        window_strides=(1, 1, k, k),
        padding=((0, 0), (0, 0), (p, ph_hi), (p, pw_hi)))


def _ref_custom_loss(y, z, y_snow_free, y_hat, z_hat, pool_levels, z_lambda):
    def cl(gen, true):
        s = jnp.zeros((), jnp.float32)
        for i in range(pool_levels + 1):
            k = 2 ** i
            d = _ref_pool(true.astype(jnp.float32), k) - _ref_pool(gen.astype(jnp.float32), k)
            s = s + jnp.sum(d * d)
        return s
    return cl(y_snow_free, y) + cl(y_hat, y) + z_lambda * cl(z_hat, z)


if __name__ == "__main__":
    pool_levels = 2
    z_lambda = 0.5

    key = jax.random.PRNGKey(0)
    kk1, kk2, kk3, kk4, kk5 = jax.random.split(key, 5)
    # y-like tensors: NCHW (2, 3, 16, 16); z-like tensors: NCHW (2, 4, 8, 8)
    y = jax.random.normal(kk1, (2, 3, 16, 16), dtype=jnp.float32)
    y_snow_free = jax.random.normal(kk2, (2, 3, 16, 16), dtype=jnp.float32)
    y_hat = jax.random.normal(kk3, (2, 3, 16, 16), dtype=jnp.float32)
    z = jax.random.normal(kk4, (2, 4, 8, 8), dtype=jnp.float32)
    z_hat = jax.random.normal(kk5, (2, 4, 8, 8), dtype=jnp.float32)

    loss = custom_loss(y, z, y_snow_free, y_hat, z_hat,
                       pool_levels=pool_levels, z_lambda=z_lambda)
    loss = jax.block_until_ready(loss)

    ref = _ref_custom_loss(y, z, y_snow_free, y_hat, z_hat, pool_levels, z_lambda)
    assert jnp.allclose(loss, ref, rtol=1e-3, atol=1e-3), (loss, ref)

    print("KERNEL_OK")
</pallas_src>

<mosaic_0001>
module attributes {stable_mosaic.version = 11 : i64} {
  func.func @_pool_sqdiff_kernel(%arg0: i32, %arg1: i32, %arg2: memref<4x8x128xf32, #tpu.memory_space<vmem>>, %arg3: memref<4x8x128xf32, #tpu.memory_space<vmem>>, %arg4: memref<4x8x128xf32, #tpu.memory_space<vmem>>, %arg5: memref<1x1x128xf32, #tpu.memory_space<vmem>>, %arg6: memref<8x128xf32, #tpu.memory_space<vmem>>) attributes {dimension_semantics = [#tpu.dimension_semantics<parallel>, #tpu.dimension_semantics<arbitrary>], iteration_bounds = array<i64: 1, 1>, scalar_prefetch = 0 : i64, scratch_operands = 1 : i64, tpu.core_type = #tpu.core_type<tc>, window_params = [{transform_indices = @transform_0, window_bounds = array<i64: 4, 8, 128>}, {transform_indices = @transform_1, window_bounds = array<i64: 4, 8, 128>}, {transform_indices = @transform_2, window_bounds = array<i64: 4, 8, 128>}, {transform_indices = @transform_3, window_bounds = array<i64: 1, 1, 128>}]} {
    %c0_i32 = arith.constant 0 : i32
    %0 = arith.cmpi eq, %arg1, %c0_i32 : i32
    %1 = arith.extui %0 : i1 to i32
    %c0_i32_0 = arith.constant 0 : i32
    %2 = arith.cmpi ne, %1, %c0_i32_0 : i32
    scf.if %2 {
      %cst = arith.constant 0.000000e+00 : f32
      %47 = vector.broadcast %cst : f32 to vector<8x128xf32>
      %c0_39 = arith.constant 0 : index
      %c0_40 = arith.constant 0 : index
      %48 = vector.load %arg6[%c0_39, %c0_40] : memref<8x128xf32, #tpu.memory_space<vmem>>, vector<8x128xf32>
      tpu.vector_store %arg6[%c0_39, %c0_40], %47 {strides = array<i32>} : memref<8x128xf32, #tpu.memory_space<vmem>>, vector<8x128xf32>,
    } else {
    }
    %c0 = arith.constant 0 : index
    %c0_1 = arith.constant 0 : index
    %c0_2 = arith.constant 0 : index
    %3 = vector.load %arg2[%c0, %c0_1, %c0_2] : memref<4x8x128xf32, #tpu.memory_space<vmem>>, vector<1x8x128xf32>
    %4 = vector.shape_cast %3 : vector<1x8x128xf32> to vector<8x128xf32>
    %c1 = arith.constant 1 : index
    %c0_3 = arith.constant 0 : index
    %c0_4 = arith.constant 0 : index
    %5 = vector.load %arg2[%c1, %c0_3, %c0_4] : memref<4x8x128xf32, #tpu.memory_space<vmem>>, vector<1x8x128xf32>
    %6 = vector.shape_cast %5 : vector<1x8x128xf32> to vector<8x128xf32>
    %7 = arith.maximumf %4, %6 : vector<8x128xf32>
    %c2 = arith.constant 2 : index
    %c0_5 = arith.constant 0 : index
    %c0_6 = arith.constant 0 : index
    %8 = vector.load %arg2[%c2, %c0_5, %c0_6] : memref<4x8x128xf32, #tpu.memory_space<vmem>>, vector<1x8x128xf32>
    %9 = vector.shape_cast %8 : vector<1x8x128xf32> to vector<8x128xf32>
    %10 = arith.maximumf %7, %9 : vector<8x128xf32>
    %c3 = arith.constant 3 : index
    %c0_7 = arith.constant 0 : index
    %c0_8 = arith.constant 0 : index
    %11 = vector.load %arg2[%c3, %c0_7, %c0_8] : memref<4x8x128xf32, #tpu.memory_space<vmem>>, vector<1x8x128xf32>
    %12 = vector.shape_cast %11 : vector<1x8x128xf32> to vector<8x128xf32>
    %13 = arith.maximumf %10, %12 : vector<8x128xf32>
    %c0_9 = arith.constant 0 : index
    %c0_10 = arith.constant 0 : index
    %14 = vector.load %arg6[%c0_9, %c0_10] : memref<8x128xf32, #tpu.memory_space<vmem>>, vector<8x128xf32>
    %c0_11 = arith.constant 0 : index
    %c0_12 = arith.constant 0 : index
    %c0_13 = arith.constant 0 : index
    %15 = vector.load %arg3[%c0_11, %c0_12, %c0_13] : memref<4x8x128xf32, #tpu.memory_space<vmem>>, vector<1x8x128xf32>
    %16 = vector.shape_cast %15 : vector<1x8x128xf32> to vector<8x128xf32>
    %c1_14 = arith.constant 1 : index
    %c0_15 = arith.constant 0 : index
    %c0_16 = arith.constant 0 : index
    %17 = vector.load %arg3[%c1_14, %c0_15, %c0_16] : memref<4x8x128xf32, #tpu.memory_space<vmem>>, vector<1x8x128xf32>
    %18 = vector.shape_cast %17 : vector<1x8x128xf32> to vector<8x128xf32>
    %19 = arith.maximumf %16, %18 : vector<8x128xf32>
    %c2_17 = arith.constant 2 : index
    %c0_18 = arith.constant 0 : index
    %c0_19 = arith.constant 0 : index
    %20 = vector.load %arg3[%c2_17, %c0_18, %c0_19] : memref<4x8x128xf32, #tpu.memory_space<vmem>>, vector<1x8x128xf32>
    %21 = vector.shape_cast %20 : vector<1x8x128xf32> to vector<8x128xf32>
    %22 = arith.maximumf %19, %21 : vector<8x128xf32>
    %c3_20 = arith.constant 3 : index
    %c0_21 = arith.constant 0 : index
    %c0_22 = arith.constant 0 : index
    %23 = vector.load %arg3[%c3_20, %c0_21, %c0_22] : memref<4x8x128xf32, #tpu.memory_space<vmem>>, vector<1x8x128xf32>
    %24 = vector.shape_cast %23 : vector<1x8x128xf32> to vector<8x128xf32>
    %25 = arith.maximumf %22, %24 : vector<8x128xf32>
    %26 = arith.subf %13, %25 : vector<8x128xf32>
    %27 = arith.mulf %26, %26 : vector<8x128xf32>
    %28 = arith.addf %14, %27 : vector<8x128xf32>
    %c0_23 = arith.constant 0 : index
    %c0_24 = arith.constant 0 : index
    %c0_25 = arith.constant 0 : index
    %29 = vector.load %arg4[%c0_23, %c0_24, %c0_25] : memref<4x8x128xf32, #tpu.memory_space<vmem>>, vector<1x8x128xf32>
    %30 = vector.shape_cast %29 : vector<1x8x128xf32> to vector<8x128xf32>
    %c1_26 = arith.constant 1 : index
    %c0_27 = arith.constant 0 : index
    %c0_28 = arith.constant 0 : index
    %31 = vector.load %arg4[%c1_26, %c0_27, %c0_28] : memref<4x8x128xf32, #tpu.memory_space<vmem>>, vector<1x8x128xf32>
    %32 = vector.shape_cast %31 : vector<1x8x128xf32> to vector<8x128xf32>
    %33 = arith.maximumf %30, %32 : vector<8x128xf32>
    %c2_29 = arith.constant 2 : index
    %c0_30 = arith.constant 0 : index
    %c0_31 = arith.constant 0 : index
    %34 = vector.load %arg4[%c2_29, %c0_30, %c0_31] : memref<4x8x128xf32, #tpu.memory_space<vmem>>, vector<1x8x128xf32>
    %35 = vector.shape_cast %34 : vector<1x8x128xf32> to vector<8x128xf32>
    %36 = arith.maximumf %33, %35 : vector<8x128xf32>
    %c3_32 = arith.constant 3 : index
    %c0_33 = arith.constant 0 : index
    %c0_34 = arith.constant 0 : index
    %37 = vector.load %arg4[%c3_32, %c0_33, %c0_34] : memref<4x8x128xf32, #tpu.memory_space<vmem>>, vector<1x8x128xf32>
    %38 = vector.shape_cast %37 : vector<1x8x128xf32> to vector<8x128xf32>
    %39 = arith.maximumf %36, %38 : vector<8x128xf32>
    %40 = arith.subf %13, %39 : vector<8x128xf32>
    %41 = arith.mulf %40, %40 : vector<8x128xf32>
    %42 = arith.addf %28, %41 : vector<8x128xf32>
    %c0_35 = arith.constant 0 : index
    %c0_36 = arith.constant 0 : index
    %43 = vector.load %arg6[%c0_35, %c0_36] : memref<8x128xf32, #tpu.memory_space<vmem>>, vector<8x128xf32>
    tpu.vector_store %arg6[%c0_35, %c0_36], %42 {strides = array<i32>} : memref<8x128xf32, #tpu.memory_space<vmem>>, vector<8x128xf32>,
    %c0_i32_37 = arith.constant 0 : i32
    %44 = arith.cmpi eq, %arg1, %c0_i32_37 : i32
    %45 = arith.extui %44 : i1 to i32
    %c0_i32_38 = arith.constant 0 : i32
    %46 = arith.cmpi ne, %45, %c0_i32_38 : i32
    scf.if %46 {
      %c0_39 = arith.constant 0 : index
      %c0_40 = arith.constant 0 : index
      %47 = vector.load %arg6[%c0_39, %c0_40] : memref<8x128xf32, #tpu.memory_space<vmem>>, vector<8x128xf32>
      %cst = arith.constant dense<0.000000e+00> : vector<128xf32>
      %48 = vector.multi_reduction <add>, %47, %cst [0] : vector<8x128xf32> to vector<128xf32>
      %49 = vector.shape_cast %48 : vector<128xf32> to vector<1x128xf32>
      %50 = vector.shape_cast %49 : vector<1x128xf32> to vector<1x1x128xf32>
      %c0_41 = arith.constant 0 : index
      %c0_42 = arith.constant 0 : index
      %c0_43 = arith.constant 0 : index
      %51 = vector.load %arg5[%c0_41, %c0_42, %c0_43] : memref<1x1x128xf32, #tpu.memory_space<vmem>>, vector<1x1x128xf32>
      tpu.vector_store %arg5[%c0_41, %c0_42, %c0_43], %50 {strides = array<i32>} : memref<1x1x128xf32, #tpu.memory_space<vmem>>, vector<1x1x128xf32>,
    } else {
    }
    return
  }
  func.func @transform_0(%arg0: i32, %arg1: i32) -> (i32, i32, i32) {
    %c1_i32 = arith.constant 1 : i32
    %0 = arith.muli %arg0, %c1_i32 : i32
    %1 = arith.addi %0, %arg1 : i32
    %c0_i32 = arith.constant 0 : i32
    %c0_i32_0 = arith.constant 0 : i32
    %c0_i32_1 = arith.constant 0 : i32
    return %c0_i32, %1, %c0_i32_0 : i32, i32, i32
  }
  func.func @transform_1(%arg0: i32, %arg1: i32) -> (i32, i32, i32) {
    %c1_i32 = arith.constant 1 : i32
    %0 = arith.muli %arg0, %c1_i32 : i32
    %1 = arith.addi %0, %arg1 : i32
    %c0_i32 = arith.constant 0 : i32
    %c0_i32_0 = arith.constant 0 : i32
    %c0_i32_1 = arith.constant 0 : i32
    return %c0_i32, %1, %c0_i32_0 : i32, i32, i32
  }
  func.func @transform_2(%arg0: i32, %arg1: i32) -> (i32, i32, i32) {
    %c1_i32 = arith.constant 1 : i32
    %0 = arith.muli %arg0, %c1_i32 : i32
    %1 = arith.addi %0, %arg1 : i32
    %c0_i32 = arith.constant 0 : i32
    %c0_i32_0 = arith.constant 0 : i32
    %c0_i32_1 = arith.constant 0 : i32
    return %c0_i32, %1, %c0_i32_0 : i32, i32, i32
  }
  func.func @transform_3(%arg0: i32, %arg1: i32) -> (i32, i32, i32) {
    %c0_i32 = arith.constant 0 : i32
    %c0_i32_0 = arith.constant 0 : i32
    %c0_i32_1 = arith.constant 0 : i32
    return %arg0, %c0_i32, %c0_i32_0 : i32, i32, i32
  }
}

module attributes {stable_mosaic.version = 11 : i64} {
  func.func @_pool_sqdiff_kernel(%arg0: i32, %arg1: i32, %arg2: memref<1x16x128xf32, #tpu.memory_space<vmem>>, %arg3: memref<1x16x128xf32, #tpu.memory_space<vmem>>, %arg4: memref<1x16x128xf32, #tpu.memory_space<vmem>>, %arg5: memref<1x1x128xf32, #tpu.memory_space<vmem>>, %arg6: memref<16x128xf32, #tpu.memory_space<vmem>>) attributes {dimension_semantics = [#tpu.dimension_semantics<parallel>, #tpu.dimension_semantics<arbitrary>], iteration_bounds = array<i64: 1, 1>, scalar_prefetch = 0 : i64, scratch_operands = 1 : i64, tpu.core_type = #tpu.core_type<tc>, window_params = [{transform_indices = @transform_0, window_bounds = array<i64: 1, 16, 128>}, {transform_indices = @transform_1, window_bounds = array<i64: 1, 16, 128>}, {transform_indices = @transform_2, window_bounds = array<i64: 1, 16, 128>}, {transform_indices = @transform_3, window_bounds = array<i64: 1, 1, 128>}]} {
    %c0_i32 = arith.constant 0 : i32
    %0 = arith.cmpi eq, %arg1, %c0_i32 : i32
    %1 = arith.extui %0 : i1 to i32
    %c0_i32_0 = arith.constant 0 : i32
    %2 = arith.cmpi ne, %1, %c0_i32_0 : i32
    scf.if %2 {
      %cst = arith.constant 0.000000e+00 : f32
      %20 = vector.broadcast %cst : f32 to vector<16x128xf32>
      %c0_15 = arith.constant 0 : index
      %c0_16 = arith.constant 0 : index
      %21 = vector.load %arg6[%c0_15, %c0_16] : memref<16x128xf32, #tpu.memory_space<vmem>>, vector<16x128xf32>
      tpu.vector_store %arg6[%c0_15, %c0_16], %20 {strides = array<i32>} : memref<16x128xf32, #tpu.memory_space<vmem>>, vector<16x128xf32>,
    } else {
    }
    %c0 = arith.constant 0 : index
    %c0_1 = arith.constant 0 : index
    %c0_2 = arith.constant 0 : index
    %3 = vector.load %arg2[%c0, %c0_1, %c0_2] : memref<1x16x128xf32, #tpu.memory_space<vmem>>, vector<1x16x128xf32>
    %4 = vector.shape_cast %3 : vector<1x16x128xf32> to vector<16x128xf32>
    %c0_3 = arith.constant 0 : index
    %c0_4 = arith.constant 0 : index
    %5 = vector.load %arg6[%c0_3, %c0_4] : memref<16x128xf32, #tpu.memory_space<vmem>>, vector<16x128xf32>
    %c0_5 = arith.constant 0 : index
    %c0_6 = arith.constant 0 : index
    %c0_7 = arith.constant 0 : index
    %6 = vector.load %arg3[%c0_5, %c0_6, %c0_7] : memref<1x16x128xf32, #tpu.memory_space<vmem>>, vector<1x16x128xf32>
    %7 = vector.shape_cast %6 : vector<1x16x128xf32> to vector<16x128xf32>
    %8 = arith.subf %4, %7 : vector<16x128xf32>
    %9 = arith.mulf %8, %8 : vector<16x128xf32>
    %10 = arith.addf %5, %9 : vector<16x128xf32>
    %c0_8 = arith.constant 0 : index
    %c0_9 = arith.constant 0 : index
    %c0_10 = arith.constant 0 : index
    %11 = vector.load %arg4[%c0_8, %c0_9, %c0_10] : memref<1x16x128xf32, #tpu.memory_space<vmem>>, vector<1x16x128xf32>
    %12 = vector.shape_cast %11 : vector<1x16x128xf32> to vector<16x128xf32>
    %13 = arith.subf %4, %12 : vector<16x128xf32>
    %14 = arith.mulf %13, %13 : vector<16x128xf32>
    %15 = arith.addf %10, %14 : vector<16x128xf32>
    %c0_11 = arith.constant 0 : index
    %c0_12 = arith.constant 0 : index
    %16 = vector.load %arg6[%c0_11, %c0_12] : memref<16x128xf32, #tpu.memory_space<vmem>>, vector<16x128xf32>
    tpu.vector_store %arg6[%c0_11, %c0_12], %15 {strides = array<i32>} : memref<16x128xf32, #tpu.memory_space<vmem>>, vector<16x128xf32>,
    %c0_i32_13 = arith.constant 0 : i32
    %17 = arith.cmpi eq, %arg1, %c0_i32_13 : i32
    %18 = arith.extui %17 : i1 to i32
    %c0_i32_14 = arith.constant 0 : i32
    %19 = arith.cmpi ne, %18, %c0_i32_14 : i32
    scf.if %19 {
      %c0_15 = arith.constant 0 : index
      %c0_16 = arith.constant 0 : index
      %20 = vector.load %arg6[%c0_15, %c0_16] : memref<16x128xf32, #tpu.memory_space<vmem>>, vector<16x128xf32>
      %cst = arith.constant dense<0.000000e+00> : vector<128xf32>
      %21 = vector.multi_reduction <add>, %20, %cst [0] : vector<16x128xf32> to vector<128xf32>
      %22 = vector.shape_cast %21 : vector<128xf32> to vector<1x128xf32>
      %23 = vector.shape_cast %22 : vector<1x128xf32> to vector<1x1x128xf32>
      %c0_17 = arith.constant 0 : index
      %c0_18 = arith.constant 0 : index
      %c0_19 = arith.constant 0 : index
      %24 = vector.load %arg5[%c0_17, %c0_18, %c0_19] : memref<1x1x128xf32, #tpu.memory_space<vmem>>, vector<1x1x128xf32>
      tpu.vector_store %arg5[%c0_17, %c0_18, %c0_19], %23 {strides = array<i32>} : memref<1x1x128xf32, #tpu.memory_space<vmem>>, vector<1x1x128xf32>,
    } else {
    }
    return
  }
  func.func @transform_0(%arg0: i32, %arg1: i32) -> (i32, i32, i32) {
    %c1_i32 = arith.constant 1 : i32
    %0 = arith.muli %arg0, %c1_i32 : i32
    %1 = arith.addi %0, %arg1 : i32
    %c0_i32 = arith.constant 0 : i32
    %c0_i32_0 = arith.constant 0 : i32
    %c0_i32_1 = arith.constant 0 : i32
    return %c0_i32, %1, %c0_i32_0 : i32, i32, i32
  }
  func.func @transform_1(%arg0: i32, %arg1: i32) -> (i32, i32, i32) {
    %c1_i32 = arith.constant 1 : i32
    %0 = arith.muli %arg0, %c1_i32 : i32
    %1 = arith.addi %0, %arg1 : i32
    %c0_i32 = arith.constant 0 : i32
    %c0_i32_0 = arith.constant 0 : i32
    %c0_i32_1 = arith.constant 0 : i32
    return %c0_i32, %1, %c0_i32_0 : i32, i32, i32
  }
  func.func @transform_2(%arg0: i32, %arg1: i32) -> (i32, i32, i32) {
    %c1_i32 = arith.constant 1 : i32
    %0 = arith.muli %arg0, %c1_i32 : i32
    %1 = arith.addi %0, %arg1 : i32
    %c0_i32 = arith.constant 0 : i32
    %c0_i32_0 = arith.constant 0 : i32
    %c0_i32_1 = arith.constant 0 : i32
    return %c0_i32, %1, %c0_i32_0 : i32, i32, i32
  }
  func.func @transform_3(%arg0: i32, %arg1: i32) -> (i32, i32, i32) {
    %c0_i32 = arith.constant 0 : i32
    %c0_i32_0 = arith.constant 0 : i32
    %c0_i32_1 = arith.constant 0 : i32
    return %arg0, %c0_i32, %c0_i32_0 : i32, i32, i32
  }
}

module attributes {stable_mosaic.version = 11 : i64} {
  func.func @_pool_sqdiff_kernel(%arg0: i32, %arg1: i32, %arg2: memref<16x8x128xf32, #tpu.memory_space<vmem>>, %arg3: memref<16x8x128xf32, #tpu.memory_space<vmem>>, %arg4: memref<16x8x128xf32, #tpu.memory_space<vmem>>, %arg5: memref<1x1x128xf32, #tpu.memory_space<vmem>>, %arg6: memref<8x128xf32, #tpu.memory_space<vmem>>) attributes {dimension_semantics = [#tpu.dimension_semantics<parallel>, #tpu.dimension_semantics<arbitrary>], iteration_bounds = array<i64: 1, 1>, scalar_prefetch = 0 : i64, scratch_operands = 1 : i64, tpu.core_type = #tpu.core_type<tc>, window_params = [{transform_indices = @transform_0, window_bounds = array<i64: 16, 8, 128>}, {transform_indices = @transform_1, window_bounds = array<i64: 16, 8, 128>}, {transform_indices = @transform_2, window_bounds = array<i64: 16, 8, 128>}, {transform_indices = @transform_3, window_bounds = array<i64: 1, 1, 128>}]} {
    %c0_i32 = arith.constant 0 : i32
    %0 = arith.cmpi eq, %arg1, %c0_i32 : i32
    %1 = arith.extui %0 : i1 to i32
    %c0_i32_0 = arith.constant 0 : i32
    %2 = arith.cmpi ne, %1, %c0_i32_0 : i32
    scf.if %2 {
      %cst = arith.constant 0.000000e+00 : f32
      %155 = vector.broadcast %cst : f32 to vector<8x128xf32>
      %c0_135 = arith.constant 0 : index
      %c0_136 = arith.constant 0 : index
      %156 = vector.load %arg6[%c0_135, %c0_136] : memref<8x128xf32, #tpu.memory_space<vmem>>, vector<8x128xf32>
      tpu.vector_store %arg6[%c0_135, %c0_136], %155 {strides = array<i32>} : memref<8x128xf32, #tpu.memory_space<vmem>>, vector<8x128xf32>,
    } else {
    }
    %c0 = arith.constant 0 : index
    %c0_1 = arith.constant 0 : index
    %c0_2 = arith.constant 0 : index
    %3 = vector.load %arg2[%c0, %c0_1, %c0_2] : memref<16x8x128xf32, #tpu.memory_space<vmem>>, vector<1x8x128xf32>
    %4 = vector.shape_cast %3 : vector<1x8x128xf32> to vector<8x128xf32>
    %c1 = arith.constant 1 : index
    %c0_3 = arith.constant 0 : index
    %c0_4 = arith.constant 0 : index
    %5 = vector.load %arg2[%c1, %c0_3, %c0_4] : memref<16x8x128xf32, #tpu.memory_space<vmem>>, vector<1x8x128xf32>
    %6 = vector.shape_cast %5 : vector<1x8x128xf32> to vector<8x128xf32>
    %7 = arith.maximumf %4, %6 : vector<8x128xf32>
    %c2 = arith.constant 2 : index
    %c0_5 = arith.constant 0 : index
    %c0_6 = arith.constant 0 : index
    %8 = vector.load %arg2[%c2, %c0_5, %c0_6] : memref<16x8x128xf32, #tpu.memory_space<vmem>>, vector<1x8x128xf32>
    %9 = vector.shape_cast %8 : vector<1x8x128xf32> to vector<8x128xf32>
    %10 = arith.maximumf %7, %9 : vector<8x128xf32>
    %c3 = arith.constant 3 : index
    %c0_7 = arith.constant 0 : index
    %c0_8 = arith.constant 0 : index
    %11 = vector.load %arg2[%c3, %c0_7, %c0_8] : memref<16x8x128xf32, #tpu.memory_space<vmem>>, vector<1x8x128xf32>
    %12 = vector.shape_cast %11 : vector<1x8x128xf32> to vector<8x128xf32>
    %13 = arith.maximumf %10, %12 : vector<8x128xf32>
    %c4 = arith.constant 4 : index
    %c0_9 = arith.constant 0 : index
    %c0_10 = arith.constant 0 : index
    %14 = vector.load %arg2[%c4, %c0_9, %c0_10] : memref<16x8x128xf32, #tpu.memory_space<vmem>>, vector<1x8x128xf32>
    %15 = vector.shape_cast %14 : vector<1x8x128xf32> to vector<8x128xf32>
    %16 = arith.maximumf %13, %15 : vector<8x128xf32>
    %c5 = arith.constant 5 : index
    %c0_11 = arith.constant 0 : index
    %c0_12 = arith.constant 0 : index
    %17 = vector.load %arg2[%c5, %c0_11, %c0_12] : memref<16x8x128xf32, #tpu.memory_space<vmem>>, vector<1x8x128xf32>
    %18 = vector.shape_cast %17 : vector<1x8x128xf32> to vector<8x128xf32>
    %19 = arith.maximumf %16, %18 : vector<8x128xf32>
    %c6 = arith.constant 6 : index
    %c0_13 = arith.constant 0 : index
    %c0_14 = arith.constant 0 : index
    %20 = vector.load %arg2[%c6, %c0_13, %c0_14] : memref<16x8x128xf32, #tpu.memory_space<vmem>>, vector<1x8x128xf32>
    %21 = vector.shape_cast %20 : vector<1x8x128xf32> to vector<8x128xf32>
    %22 = arith.maximumf %19, %21 : vector<8x128xf32>
    %c7 = arith.constant 7 : index
    %c0_15 = arith.constant 0 : index
    %c0_16 = arith.constant 0 : index
    %23 = vector.load %arg2[%c7, %c0_15, %c0_16] : memref<16x8x128xf32, #tpu.memory_space<vmem>>, vector<1x8x128xf32>
    %24 = vector.shape_cast %23 : vector<1x8x128xf32> to vector<8x128xf32>
    %25 = arith.maximumf %22, %24 : vector<8x128xf32>
    %c8 = arith.constant 8 : index
    %c0_17 = arith.constant 0 : index
    %c0_18 = arith.constant 0 : index
    %26 = vector.load %arg2[%c8, %c0_17, %c0_18] : memref<16x8x128xf32, #tpu.memory_space<vmem>>, vector<1x8x128xf32>
    %27 = vector.shape_cast %26 : vector<1x8x128xf32> to vector<8x128xf32>
    %28 = arith.maximumf %25, %27 : vector<8x128xf32>
    %c9 = arith.constant 9 : index
    %c0_19 = arith.constant 0 : index
    %c0_20 = arith.constant 0 : index
    %29 = vector.load %arg2[%c9, %c0_19, %c0_20] : memref<16x8x128xf32, #tpu.memory_space<vmem>>, vector<1x8x128xf32>
    %30 = vector.shape_cast %29 : vector<1x8x128xf32> to vector<8x128xf32>
    %31 = arith.maximumf %28, %30 : vector<8x128xf32>
    %c10 = arith.constant 10 : index
    %c0_21 = arith.constant 0 : index
    %c0_22 = arith.constant 0 : index
    %32 = vector.load %arg2[%c10, %c0_21, %c0_22] : memref<16x8x128xf32, #tpu.memory_space<vmem>>, vector<1x8x128xf32>
    %33 = vector.shape_cast %32 : vector<1x8x128xf32> to vector<8x128xf32>
    %34 = arith.maximumf %31, %33 : vector<8x128xf32>
    %c11 = arith.constant 11 : index
    %c0_23 = arith.constant 0 : index
    %c0_24 = arith.constant 0 : index
    %35 = vector.load %arg2[%c11, %c0_23, %c0_24] : memref<16x8x128xf32, #tpu.memory_space<vmem>>, vector<1x8x128xf32>
    %36 = vector.shape_cast %35 : vector<1x8x128xf32> to vector<8x128xf32>
    %37 = arith.maximumf %34, %36 : vector<8x128xf32>
    %c12 = arith.constant 12 : index
    %c0_25 = arith.constant 0 : index
    %c0_26 = arith.constant 0 : index
    %38 = vector.load %arg2[%c12, %c0_25, %c0_26] : memref<16x8x128xf32, #tpu.memory_space<vmem>>, vector<1x8x128xf32>
    %39 = vector.shape_cast %38 : vector<1x8x128xf32> to vector<8x128xf32>
    %40 = arith.maximumf %37, %39 : vector<8x128xf32>
    %c13 = arith.constant 13 : index
    %c0_27 = arith.constant 0 : index
    %c0_28 = arith.constant 0 : index
    %41 = vector.load %arg2[%c13, %c0_27, %c0_28] : memref<16x8x128xf32, #tpu.memory_space<vmem>>, vector<1x8x128xf32>
    %42 = vector.shape_cast %41 : vector<1x8x128xf32> to vector<8x128xf32>
    %43 = arith.maximumf %40, %42 : vector<8x128xf32>
    %c14 = arith.constant 14 : index
    %c0_29 = arith.constant 0 : index
    %c0_30 = arith.constant 0 : index
    %44 = vector.load %arg2[%c14, %c0_29, %c0_30] : memref<16x8x128xf32, #tpu.memory_space<vmem>>, vector<1x8x128xf32>
    %45 = vector.shape_cast %44 : vector<1x8x128xf32> to vector<8x128xf32>
    %46 = arith.maximumf %43, %45 : vector<8x128xf32>
    %c15 = arith.constant 15 : index
    %c0_31 = arith.constant 0 : index
    %c0_32 = arith.constant 0 : index
    %47 = vector.load %arg2[%c15, %c0_31, %c0_32] : memref<16x8x128xf32, #tpu.memory_space<vmem>>, vector<1x8x128xf32>
    %48 = vector.shape_cast %47 : vector<1x8x128xf32> to vector<8x128xf32>
    %49 = arith.maximumf %46, %48 : vector<8x128xf32>
    %c0_33 = arith.constant 0 : index
    %c0_34 = arith.constant 0 : index
    %50 = vector.load %arg6[%c0_33, %c0_34] : memref<8x128xf32, #tpu.memory_space<vmem>>, vector<8x128xf32>
    %c0_35 = arith.constant 0 : index
    %c0_36 = arith.constant 0 : index
    %c0_37 = arith.constant 0 : index
    %51 = vector.load %arg3[%c0_35, %c0_36, %c0_37] : memref<16x8x128xf32, #tpu.memory_space<vmem>>, vector<1x8x128xf32>
    %52 = vector.shape_cast %51 : vector<1x8x128xf32> to vector<8x128xf32>
    %c1_38 = arith.constant 1 : index
    %c0_39 = arith.constant 0 : index
    %c0_40 = arith.constant 0 : index
    %53 = vector.load %arg3[%c1_38, %c0_39, %c0_40] : memref<16x8x128xf32, #tpu.memory_space<vmem>>, vector<1x8x128xf32>
    %54 = vector.shape_cast %53 : vector<1x8x128xf32> to vector<8x128xf32>
    %55 = arith.maximumf %52, %54 : vector<8x128xf32>
    %c2_41 = arith.constant 2 : index
    %c0_42 = arith.constant 0 : index
    %c0_43 = arith.constant 0 : index
    %56 = vector.load %arg3[%c2_41, %c0_42, %c0_43] : memref<16x8x128xf32, #tpu.memory_space<vmem>>, vector<1x8x128xf32>
    %57 = vector.shape_cast %56 : vector<1x8x128xf32> to vector<8x128xf32>
    %58 = arith.maximumf %55, %57 : vector<8x128xf32>
    %c3_44 = arith.constant 3 : index
    %c0_45 = arith.constant 0 : index
    %c0_46 = arith.constant 0 : index
    %59 = vector.load %arg3[%c3_44, %c0_45, %c0_46] : memref<16x8x128xf32, #tpu.memory_space<vmem>>, vector<1x8x128xf32>
    %60 = vector.shape_cast %59 : vector<1x8x128xf32> to vector<8x128xf32>
    %61 = arith.maximumf %58, %60 : vector<8x128xf32>
    %c4_47 = arith.constant 4 : index
    %c0_48 = arith.constant 0 : index
    %c0_49 = arith.constant 0 : index
    %62 = vector.load %arg3[%c4_47, %c0_48, %c0_49] : memref<16x8x128xf32, #tpu.memory_space<vmem>>, vector<1x8x128xf32>
    %63 = vector.shape_cast %62 : vector<1x8x128xf32> to vector<8x128xf32>
    %64 = arith.maximumf %61, %63 : vector<8x128xf32>
    %c5_50 = arith.constant 5 : index
    %c0_51 = arith.constant 0 : index
    %c0_52 = arith.constant 0 : index
    %65 = vector.load %arg3[%c5_50, %c0_51, %c0_52] : memref<16x8x128xf32, #tpu.memory_space<vmem>>, vector<1x8x128xf32>
    %66 = vector.shape_cast %65 : vector<1x8x128xf32> to vector<8x128xf32>
    %67 = arith.maximumf %64, %66 : vector<8x128xf32>
    %c6_53 = arith.constant 6 : index
    %c0_54 = arith.constant 0 : index
    %c0_55 = arith.constant 0 : index
    %68 = vector.load %arg3[%c6_53, %c0_54, %c0_55] : memref<16x8x128xf32, #tpu.memory_space<vmem>>, vector<1x8x128xf32>
    %69 = vector.shape_cast %68 : vector<1x8x128xf32> to vector<8x128xf32>
    %70 = arith.maximumf %67, %69 : vector<8x128xf32>
    %c7_56 = arith.constant 7 : index
    %c0_57 = arith.constant 0 : index
    %c0_58 = arith.constant 0 : index
    %71 = vector.load %arg3[%c7_56, %c0_57, %c0_58] : memref<16x8x128xf32, #tpu.memory_space<vmem>>, vector<1x8x128xf32>
    %72 = vector.shape_cast %71 : vector<1x8x128xf32> to vector<8x128xf32>
    %73 = arith.maximumf %70, %72 : vector<8x128xf32>
    %c8_59 = arith.constant 8 : index
    %c0_60 = arith.constant 0 : index
    %c0_61 = arith.constant 0 : index
    %74 = vector.load %arg3[%c8_59, %c0_60, %c0_61] : memref<16x8x128xf32, #tpu.memory_space<vmem>>, vector<1x8x128xf32>
    %75 = vector.shape_cast %74 : vector<1x8x128xf32> to vector<8x128xf32>
    %76 = arith.maximumf %73, %75 : vector<8x128xf32>
    %c9_62 = arith.constant 9 : index
    %c0_63 = arith.constant 0 : index
    %c0_64 = arith.constant 0 : index
    %77 = vector.load %arg3[%c9_62, %c0_63, %c0_64] : memref<16x8x128xf32, #tpu.memory_space<vmem>>, vector<1x8x128xf32>
    %78 = vector.shape_cast %77 : vector<1x8x128xf32> to vector<8x128xf32>
    %79 = arith.maximumf %76, %78 : vector<8x128xf32>
    %c10_65 = arith.constant 10 : index
    %c0_66 = arith.constant 0 : index
    %c0_67 = arith.constant 0 : index
    %80 = vector.load %arg3[%c10_65, %c0_66, %c0_67] : memref<16x8x128xf32, #tpu.memory_space<vmem>>, vector<1x8x128xf32>
    %81 = vector.shape_cast %80 : vector<1x8x128xf32> to vector<8x128xf32>
    %82 = arith.maximumf %79, %81 : vector<8x128xf32>
    %c11_68 = arith.constant 11 : index
    %c0_69 = arith.constant 0 : index
    %c0_70 = arith.constant 0 : index
    %83 = vector.load %arg3[%c11_68, %c0_69, %c0_70] : memref<16x8x128xf32, #tpu.memory_space<vmem>>, vector<1x8x128xf32>
    %84 = vector.shape_cast %83 : vector<1x8x128xf32> to vector<8x128xf32>
    %85 = arith.maximumf %82, %84 : vector<8x128xf32>
    %c12_71 = arith.constant 12 : index
    %c0_72 = arith.constant 0 : index
    %c0_73 = arith.constant 0 : index
    %86 = vector.load %arg3[%c12_71, %c0_72, %c0_73] : memref<16x8x128xf32, #tpu.memory_space<vmem>>, vector<1x8x128xf32>
    %87 = vector.shape_cast %86 : vector<1x8x128xf32> to vector<8x128xf32>
    %88 = arith.maximumf %85, %87 : vector<8x128xf32>
    %c13_74 = arith.constant 13 : index
    %c0_75 = arith.constant 0 : index
    %c0_76 = arith.constant 0 : index
    %89 = vector.load %arg3[%c13_74, %c0_75, %c0_76] : memref<16x8x128xf32, #tpu.memory_space<vmem>>, vector<1x8x128xf32>
    %90 = vector.shape_cast %89 : vector<1x8x128xf32> to vector<8x128xf32>
    %91 = arith.maximumf %88, %90 : vector<8x128xf32>
    %c14_77 = arith.constant 14 : index
    %c0_78 = arith.constant 0 : index
    %c0_79 = arith.constant 0 : index
    %92 = vector.load %arg3[%c14_77, %c0_78, %c0_79] : memref<16x8x128xf32, #tpu.memory_space<vmem>>, vector<1x8x128xf32>
    %93 = vector.shape_cast %92 : vector<1x8x128xf32> to vector<8x128xf32>
    %94 = arith.maximumf %91, %93 : vector<8x128xf32>
    %c15_80 = arith.constant 15 : index
    %c0_81 = arith.constant 0 : index
    %c0_82 = arith.constant 0 : index
    %95 = vector.load %arg3[%c15_80, %c0_81, %c0_82] : memref<16x8x128xf32, #tpu.memory_space<vmem>>, vector<1x8x128xf32>
    %96 = vector.shape_cast %95 : vector<1x8x128xf32> to vector<8x128xf32>
    %97 = arith.maximumf %94, %96 : vector<8x128xf32>
    %98 = arith.subf %49, %97 : vector<8x128xf32>
    %99 = arith.mulf %98, %98 : vector<8x128xf32>
    %100 = arith.addf %50, %99 : vector<8x128xf32>
    %c0_83 = arith.constant 0 : index
    %c0_84 = arith.constant 0 : index
    %c0_85 = arith.constant 0 : index
    %101 = vector.load %arg4[%c0_83, %c0_84, %c0_85] : memref<16x8x128xf32, #tpu.memory_space<vmem>>, vector<1x8x128xf32>
    %102 = vector.shape_cast %101 : vector<1x8x128xf32> to vector<8x128xf32>
    %c1_86 = arith.constant 1 : index
    %c0_87 = arith.constant 0 : index
    %c0_88 = arith.constant 0 : index
    %103 = vector.load %arg4[%c1_86, %c0_87, %c0_88] : memref<16x8x128xf32, #tpu.memory_space<vmem>>, vector<1x8x128xf32>
    %104 = vector.shape_cast %103 : vector<1x8x128xf32> to vector<8x128xf32>
    %105 = arith.maximumf %102, %104 : vector<8x128xf32>
    %c2_89 = arith.constant 2 : index
    %c0_90 = arith.constant 0 : index
    %c0_91 = arith.constant 0 : index
    %106 = vector.load %arg4[%c2_89, %c0_90, %c0_91] : memref<16x8x128xf32, #tpu.memory_space<vmem>>, vector<1x8x128xf32>
    %107 = vector.shape_cast %106 : vector<1x8x128xf32> to vector<8x128xf32>
    %108 = arith.maximumf %105, %107 : vector<8x128xf32>
    %c3_92 = arith.constant 3 : index
    %c0_93 = arith.constant 0 : index
    %c0_94 = arith.constant 0 : index
    %109 = vector.load %arg4[%c3_92, %c0_93, %c0_94] : memref<16x8x128xf32, #tpu.memory_space<vmem>>, vector<1x8x128xf32>
    %110 = vector.shape_cast %109 : vector<1x8x128xf32> to vector<8x128xf32>
    %111 = arith.maximumf %108, %110 : vector<8x128xf32>
    %c4_95 = arith.constant 4 : index
    %c0_96 = arith.constant 0 : index
    %c0_97 = arith.constant 0 : index
    %112 = vector.load %arg4[%c4_95, %c0_96, %c0_97] : memref<16x8x128xf32, #tpu.memory_space<vmem>>, vector<1x8x128xf32>
    %113 = vector.shape_cast %112 : vector<1x8x128xf32> to vector<8x128xf32>
    %114 = arith.maximumf %111, %113 : vector<8x128xf32>
    %c5_98 = arith.constant 5 : index
    %c0_99 = arith.constant 0 : index
    %c0_100 = arith.constant 0 : index
    %115 = vector.load %arg4[%c5_98, %c0_99, %c0_100] : memref<16x8x128xf32, #tpu.memory_space<vmem>>, vector<1x8x128xf32>
    %116 = vector.shape_cast %115 : vector<1x8x128xf32> to vector<8x128xf32>
    %117 = arith.maximumf %114, %116 : vector<8x128xf32>
    %c6_101 = arith.constant 6 : index
    %c0_102 = arith.constant 0 : index
    %c0_103 = arith.constant 0 : index
    %118 = vector.load %arg4[%c6_101, %c0_102, %c0_103] : memref<16x8x128xf32, #tpu.memory_space<vmem>>, vector<1x8x128xf32>
    %119 = vector.shape_cast %118 : vector<1x8x128xf32> to vector<8x128xf32>
    %120 = arith.maximumf %117, %119 : vector<8x128xf32>
    %c7_104 = arith.constant 7 : index
    %c0_105 = arith.constant 0 : index
    %c0_106 = arith.constant 0 : index
    %121 = vector.load %arg4[%c7_104, %c0_105, %c0_106] : memref<16x8x128xf32, #tpu.memory_space<vmem>>, vector<1x8x128xf32>
    %122 = vector.shape_cast %121 : vector<1x8x128xf32> to vector<8x128xf32>
    %123 = arith.maximumf %120, %122 : vector<8x128xf32>
    %c8_107 = arith.constant 8 : index
    %c0_108 = arith.constant 0 : index
    %c0_109 = arith.constant 0 : index
    %124 = vector.load %arg4[%c8_107, %c0_108, %c0_109] : memref<16x8x128xf32, #tpu.memory_space<vmem>>, vector<1x8x128xf32>
    %125 = vector.shape_cast %124 : vector<1x8x128xf32> to vector<8x128xf32>
    %126 = arith.maximumf %123, %125 : vector<8x128xf32>
    %c9_110 = arith.constant 9 : index
    %c0_111 = arith.constant 0 : index
    %c0_112 = arith.constant 0 : index
    %127 = vector.load %arg4[%c9_110, %c0_111, %c0_112] : memref<16x8x128xf32, #tpu.memory_space<vmem>>, vector<1x8x128xf32>
    %128 = vector.shape_cast %127 : vector<1x8x128xf32> to vector<8x128xf32>
    %129 = arith.maximumf %126, %128 : vector<8x128xf32>
    %c10_113 = arith.constant 10 : index
    %c0_114 = arith.constant 0 : index
    %c0_115 = arith.constant 0 : index
    %130 = vector.load %arg4[%c10_113, %c0_114, %c0_115] : memref<16x8x128xf32, #tpu.memory_space<vmem>>, vector<1x8x128xf32>
    %131 = vector.shape_cast %130 : vector<1x8x128xf32> to vector<8x128xf32>
    %132 = arith.maximumf %129, %131 : vector<8x128xf32>
    %c11_116 = arith.constant 11 : index
    %c0_117 = arith.constant 0 : index
    %c0_118 = arith.constant 0 : index
    %133 = vector.load %arg4[%c11_116, %c0_117, %c0_118] : memref<16x8x128xf32, #tpu.memory_space<vmem>>, vector<1x8x128xf32>
    %134 = vector.shape_cast %133 : vector<1x8x128xf32> to vector<8x128xf32>
    %135 = arith.maximumf %132, %134 : vector<8x128xf32>
    %c12_119 = arith.constant 12 : index
    %c0_120 = arith.constant 0 : index
    %c0_121 = arith.constant 0 : index
    %136 = vector.load %arg4[%c12_119, %c0_120, %c0_121] : memref<16x8x128xf32, #tpu.memory_space<vmem>>, vector<1x8x128xf32>
    %137 = vector.shape_cast %136 : vector<1x8x128xf32> to vector<8x128xf32>
    %138 = arith.maximumf %135, %137 : vector<8x128xf32>
    %c13_122 = arith.constant 13 : index
    %c0_123 = arith.constant 0 : index
    %c0_124 = arith.constant 0 : index
    %139 = vector.load %arg4[%c13_122, %c0_123, %c0_124] : memref<16x8x128xf32, #tpu.memory_space<vmem>>, vector<1x8x128xf32>
    %140 = vector.shape_cast %139 : vector<1x8x128xf32> to vector<8x128xf32>
    %141 = arith.maximumf %138, %140 : vector<8x128xf32>
    %c14_125 = arith.constant 14 : index
    %c0_126 = arith.constant 0 : index
    %c0_127 = arith.constant 0 : index
    %142 = vector.load %arg4[%c14_125, %c0_126, %c0_127] : memref<16x8x128xf32, #tpu.memory_space<vmem>>, vector<1x8x128xf32>
    %143 = vector.shape_cast %142 : vector<1x8x128xf32> to vector<8x128xf32>
    %144 = arith.maximumf %141, %143 : vector<8x128xf32>
    %c15_128 = arith.constant 15 : index
    %c0_129 = arith.constant 0 : index
    %c0_130 = arith.constant 0 : index
    %145 = vector.load %arg4[%c15_128, %c0_129, %c0_130] : memref<16x8x128xf32, #tpu.memory_space<vmem>>, vector<1x8x128xf32>
    %146 = vector.shape_cast %145 : vector<1x8x128xf32> to vector<8x128xf32>
    %147 = arith.maximumf %144, %146 : vector<8x128xf32>
    %148 = arith.subf %49, %147 : vector<8x128xf32>
    %149 = arith.mulf %148, %148 : vector<8x128xf32>
    %150 = arith.addf %100, %149 : vector<8x128xf32>
    %c0_131 = arith.constant 0 : index
    %c0_132 = arith.constant 0 : index
    %151 = vector.load %arg6[%c0_131, %c0_132] : memref<8x128xf32, #tpu.memory_space<vmem>>, vector<8x128xf32>
    tpu.vector_store %arg6[%c0_131, %c0_132], %150 {strides = array<i32>} : memref<8x128xf32, #tpu.memory_space<vmem>>, vector<8x128xf32>,
    %c0_i32_133 = arith.constant 0 : i32
    %152 = arith.cmpi eq, %arg1, %c0_i32_133 : i32
    %153 = arith.extui %152 : i1 to i32
    %c0_i32_134 = arith.constant 0 : i32
    %154 = arith.cmpi ne, %153, %c0_i32_134 : i32
    scf.if %154 {
      %c0_135 = arith.constant 0 : index
      %c0_136 = arith.constant 0 : index
      %155 = vector.load %arg6[%c0_135, %c0_136] : memref<8x128xf32, #tpu.memory_space<vmem>>, vector<8x128xf32>
      %cst = arith.constant dense<0.000000e+00> : vector<128xf32>
      %156 = vector.multi_reduction <add>, %155, %cst [0] : vector<8x128xf32> to vector<128xf32>
      %157 = vector.shape_cast %156 : vector<128xf32> to vector<1x128xf32>
      %158 = vector.shape_cast %157 : vector<1x128xf32> to vector<1x1x128xf32>
      %c0_137 = arith.constant 0 : index
      %c0_138 = arith.constant 0 : index
      %c0_139 = arith.constant 0 : index
      %159 = vector.load %arg5[%c0_137, %c0_138, %c0_139] : memref<1x1x128xf32, #tpu.memory_space<vmem>>, vector<1x1x128xf32>
      tpu.vector_store %arg5[%c0_137, %c0_138, %c0_139], %158 {strides = array<i32>} : memref<1x1x128xf32, #tpu.memory_space<vmem>>, vector<1x1x128xf32>,
    } else {
    }
    return
  }
  func.func @transform_0(%arg0: i32, %arg1: i32) -> (i32, i32, i32) {
    %c1_i32 = arith.constant 1 : i32
    %0 = arith.muli %arg0, %c1_i32 : i32
    %1 = arith.addi %0, %arg1 : i32
    %c0_i32 = arith.constant 0 : i32
    %c0_i32_0 = arith.constant 0 : i32
    %c0_i32_1 = arith.constant 0 : i32
    return %c0_i32, %1, %c0_i32_0 : i32, i32, i32
  }
  func.func @transform_1(%arg0: i32, %arg1: i32) -> (i32, i32, i32) {
    %c1_i32 = arith.constant 1 : i32
    %0 = arith.muli %arg0, %c1_i32 : i32
    %1 = arith.addi %0, %arg1 : i32
    %c0_i32 = arith.constant 0 : i32
    %c0_i32_0 = arith.constant 0 : i32
    %c0_i32_1 = arith.constant 0 : i32
    return %c0_i32, %1, %c0_i32_0 : i32, i32, i32
  }
  func.func @transform_2(%arg0: i32, %arg1: i32) -> (i32, i32, i32) {
    %c1_i32 = arith.constant 1 : i32
    %0 = arith.muli %arg0, %c1_i32 : i32
    %1 = arith.addi %0, %arg1 : i32
    %c0_i32 = arith.constant 0 : i32
    %c0_i32_0 = arith.constant 0 : i32
    %c0_i32_1 = arith.constant 0 : i32
    return %c0_i32, %1, %c0_i32_0 : i32, i32, i32
  }
  func.func @transform_3(%arg0: i32, %arg1: i32) -> (i32, i32, i32) {
    %c0_i32 = arith.constant 0 : i32
    %c0_i32_0 = arith.constant 0 : i32
    %c0_i32_1 = arith.constant 0 : i32
    return %arg0, %c0_i32, %c0_i32_0 : i32, i32, i32
  }
}

module attributes {stable_mosaic.version = 11 : i64} {
  func.func @_pool_sqdiff_kernel(%arg0: i32, %arg1: i32, %arg2: memref<4x8x128xf32, #tpu.memory_space<vmem>>, %arg3: memref<4x8x128xf32, #tpu.memory_space<vmem>>, %arg4: memref<1x1x128xf32, #tpu.memory_space<vmem>>, %arg5: memref<8x128xf32, #tpu.memory_space<vmem>>) attributes {dimension_semantics = [#tpu.dimension_semantics<parallel>, #tpu.dimension_semantics<arbitrary>], iteration_bounds = array<i64: 1, 1>, scalar_prefetch = 0 : i64, scratch_operands = 1 : i64, tpu.core_type = #tpu.core_type<tc>, window_params = [{transform_indices = @transform_0, window_bounds = array<i64: 4, 8, 128>}, {transform_indices = @transform_1, window_bounds = array<i64: 4, 8, 128>}, {transform_indices = @transform_2, window_bounds = array<i64: 1, 1, 128>}]} {
    %c0_i32 = arith.constant 0 : i32
    %0 = arith.cmpi eq, %arg1, %c0_i32 : i32
    %1 = arith.extui %0 : i1 to i32
    %c0_i32_0 = arith.constant 0 : i32
    %2 = arith.cmpi ne, %1, %c0_i32_0 : i32
    scf.if %2 {
      %cst = arith.constant 0.000000e+00 : f32
      %33 = vector.broadcast %cst : f32 to vector<8x128xf32>
      %c0_27 = arith.constant 0 : index
      %c0_28 = arith.constant 0 : index
      %34 = vector.load %arg5[%c0_27, %c0_28] : memref<8x128xf32, #tpu.memory_space<vmem>>, vector<8x128xf32>
      tpu.vector_store %arg5[%c0_27, %c0_28], %33 {strides = array<i32>} : memref<8x128xf32, #tpu.memory_space<vmem>>, vector<8x128xf32>,
    } else {
    }
    %c0 = arith.constant 0 : index
    %c0_1 = arith.constant 0 : index
    %c0_2 = arith.constant 0 : index
    %3 = vector.load %arg2[%c0, %c0_1, %c0_2] : memref<4x8x128xf32, #tpu.memory_space<vmem>>, vector<1x8x128xf32>
    %4 = vector.shape_cast %3 : vector<1x8x128xf32> to vector<8x128xf32>
    %c1 = arith.constant 1 : index
    %c0_3 = arith.constant 0 : index
    %c0_4 = arith.constant 0 : index
    %5 = vector.load %arg2[%c1, %c0_3, %c0_4] : memref<4x8x128xf32, #tpu.memory_space<vmem>>, vector<1x8x128xf32>
    %6 = vector.shape_cast %5 : vector<1x8x128xf32> to vector<8x128xf32>
    %7 = arith.maximumf %4, %6 : vector<8x128xf32>
    %c2 = arith.constant 2 : index
    %c0_5 = arith.constant 0 : index
    %c0_6 = arith.constant 0 : index
    %8 = vector.load %arg2[%c2, %c0_5, %c0_6] : memref<4x8x128xf32, #tpu.memory_space<vmem>>, vector<1x8x128xf32>
    %9 = vector.shape_cast %8 : vector<1x8x128xf32> to vector<8x128xf32>
    %10 = arith.maximumf %7, %9 : vector<8x128xf32>
    %c3 = arith.constant 3 : index
    %c0_7 = arith.constant 0 : index
    %c0_8 = arith.constant 0 : index
    %11 = vector.load %arg2[%c3, %c0_7, %c0_8] : memref<4x8x128xf32, #tpu.memory_space<vmem>>, vector<1x8x128xf32>
    %12 = vector.shape_cast %11 : vector<1x8x128xf32> to vector<8x128xf32>
    %13 = arith.maximumf %10, %12 : vector<8x128xf32>
    %c0_9 = arith.constant 0 : index
    %c0_10 = arith.constant 0 : index
    %14 = vector.load %arg5[%c0_9, %c0_10] : memref<8x128xf32, #tpu.memory_space<vmem>>, vector<8x128xf32>
    %c0_11 = arith.constant 0 : index
    %c0_12 = arith.constant 0 : index
    %c0_13 = arith.constant 0 : index
    %15 = vector.load %arg3[%c0_11, %c0_12, %c0_13] : memref<4x8x128xf32, #tpu.memory_space<vmem>>, vector<1x8x128xf32>
    %16 = vector.shape_cast %15 : vector<1x8x128xf32> to vector<8x128xf32>
    %c1_14 = arith.constant 1 : index
    %c0_15 = arith.constant 0 : index
    %c0_16 = arith.constant 0 : index
    %17 = vector.load %arg3[%c1_14, %c0_15, %c0_16] : memref<4x8x128xf32, #tpu.memory_space<vmem>>, vector<1x8x128xf32>
    %18 = vector.shape_cast %17 : vector<1x8x128xf32> to vector<8x128xf32>
    %19 = arith.maximumf %16, %18 : vector<8x128xf32>
    %c2_17 = arith.constant 2 : index
    %c0_18 = arith.constant 0 : index
    %c0_19 = arith.constant 0 : index
    %20 = vector.load %arg3[%c2_17, %c0_18, %c0_19] : memref<4x8x128xf32, #tpu.memory_space<vmem>>, vector<1x8x128xf32>
    %21 = vector.shape_cast %20 : vector<1x8x128xf32> to vector<8x128xf32>
    %22 = arith.maximumf %19, %21 : vector<8x128xf32>
    %c3_20 = arith.constant 3 : index
    %c0_21 = arith.constant 0 : index
    %c0_22 = arith.constant 0 : index
    %23 = vector.load %arg3[%c3_20, %c0_21, %c0_22] : memref<4x8x128xf32, #tpu.memory_space<vmem>>, vector<1x8x128xf32>
    %24 = vector.shape_cast %23 : vector<1x8x128xf32> to vector<8x128xf32>
    %25 = arith.maximumf %22, %24 : vector<8x128xf32>
    %26 = arith.subf %13, %25 : vector<8x128xf32>
    %27 = arith.mulf %26, %26 : vector<8x128xf32>
    %28 = arith.addf %14, %27 : vector<8x128xf32>
    %c0_23 = arith.constant 0 : index
    %c0_24 = arith.constant 0 : index
    %29 = vector.load %arg5[%c0_23, %c0_24] : memref<8x128xf32, #tpu.memory_space<vmem>>, vector<8x128xf32>
    tpu.vector_store %arg5[%c0_23, %c0_24], %28 {strides = array<i32>} : memref<8x128xf32, #tpu.memory_space<vmem>>, vector<8x128xf32>,
    %c0_i32_25 = arith.constant 0 : i32
    %30 = arith.cmpi eq, %arg1, %c0_i32_25 : i32
    %31 = arith.extui %30 : i1 to i32
    %c0_i32_26 = arith.constant 0 : i32
    %32 = arith.cmpi ne, %31, %c0_i32_26 : i32
    scf.if %32 {
      %c0_27 = arith.constant 0 : index
      %c0_28 = arith.constant 0 : index
      %33 = vector.load %arg5[%c0_27, %c0_28] : memref<8x128xf32, #tpu.memory_space<vmem>>, vector<8x128xf32>
      %cst = arith.constant dense<0.000000e+00> : vector<128xf32>
      %34 = vector.multi_reduction <add>, %33, %cst [0] : vector<8x128xf32> to vector<128xf32>
      %35 = vector.shape_cast %34 : vector<128xf32> to vector<1x128xf32>
      %36 = vector.shape_cast %35 : vector<1x128xf32> to vector<1x1x128xf32>
      %c0_29 = arith.constant 0 : index
      %c0_30 = arith.constant 0 : index
      %c0_31 = arith.constant 0 : index
      %37 = vector.load %arg4[%c0_29, %c0_30, %c0_31] : memref<1x1x128xf32, #tpu.memory_space<vmem>>, vector<1x1x128xf32>
      tpu.vector_store %arg4[%c0_29, %c0_30, %c0_31], %36 {strides = array<i32>} : memref<1x1x128xf32, #tpu.memory_space<vmem>>, vector<1x1x128xf32>,
    } else {
    }
    return
  }
  func.func @transform_0(%arg0: i32, %arg1: i32) -> (i32, i32, i32) {
    %c1_i32 = arith.constant 1 : i32
    %0 = arith.muli %arg0, %c1_i32 : i32
    %1 = arith.addi %0, %arg1 : i32
    %c0_i32 = arith.constant 0 : i32
    %c0_i32_0 = arith.constant 0 : i32
    %c0_i32_1 = arith.constant 0 : i32
    return %c0_i32, %1, %c0_i32_0 : i32, i32, i32
  }
  func.func @transform_1(%arg0: i32, %arg1: i32) -> (i32, i32, i32) {
    %c1_i32 = arith.constant 1 : i32
    %0 = arith.muli %arg0, %c1_i32 : i32
    %1 = arith.addi %0, %arg1 : i32
    %c0_i32 = arith.constant 0 : i32
    %c0_i32_0 = arith.constant 0 : i32
    %c0_i32_1 = arith.constant 0 : i32
    return %c0_i32, %1, %c0_i32_0 : i32, i32, i32
  }
  func.func @transform_2(%arg0: i32, %arg1: i32) -> (i32, i32, i32) {
    %c0_i32 = arith.constant 0 : i32
    %c0_i32_0 = arith.constant 0 : i32
    %c0_i32_1 = arith.constant 0 : i32
    return %arg0, %c0_i32, %c0_i32_0 : i32, i32, i32
  }
}

module attributes {stable_mosaic.version = 11 : i64} {
  func.func @_pool_sqdiff_kernel(%arg0: i32, %arg1: i32, %arg2: memref<1x8x128xf32, #tpu.memory_space<vmem>>, %arg3: memref<1x8x128xf32, #tpu.memory_space<vmem>>, %arg4: memref<1x1x128xf32, #tpu.memory_space<vmem>>, %arg5: memref<8x128xf32, #tpu.memory_space<vmem>>) attributes {dimension_semantics = [#tpu.dimension_semantics<parallel>, #tpu.dimension_semantics<arbitrary>], iteration_bounds = array<i64: 1, 1>, scalar_prefetch = 0 : i64, scratch_operands = 1 : i64, tpu.core_type = #tpu.core_type<tc>, window_params = [{transform_indices = @transform_0, window_bounds = array<i64: 1, 8, 128>}, {transform_indices = @transform_1, window_bounds = array<i64: 1, 8, 128>}, {transform_indices = @transform_2, window_bounds = array<i64: 1, 1, 128>}]} {
    %c0_i32 = arith.constant 0 : i32
    %0 = arith.cmpi eq, %arg1, %c0_i32 : i32
    %1 = arith.extui %0 : i1 to i32
    %c0_i32_0 = arith.constant 0 : i32
    %2 = arith.cmpi ne, %1, %c0_i32_0 : i32
    scf.if %2 {
      %cst = arith.constant 0.000000e+00 : f32
      %15 = vector.broadcast %cst : f32 to vector<8x128xf32>
      %c0_12 = arith.constant 0 : index
      %c0_13 = arith.constant 0 : index
      %16 = vector.load %arg5[%c0_12, %c0_13] : memref<8x128xf32, #tpu.memory_space<vmem>>, vector<8x128xf32>
      tpu.vector_store %arg5[%c0_12, %c0_13], %15 {strides = array<i32>} : memref<8x128xf32, #tpu.memory_space<vmem>>, vector<8x128xf32>,
    } else {
    }
    %c0 = arith.constant 0 : index
    %c0_1 = arith.constant 0 : index
    %c0_2 = arith.constant 0 : index
    %3 = vector.load %arg2[%c0, %c0_1, %c0_2] : memref<1x8x128xf32, #tpu.memory_space<vmem>>, vector<1x8x128xf32>
    %4 = vector.shape_cast %3 : vector<1x8x128xf32> to vector<8x128xf32>
    %c0_3 = arith.constant 0 : index
    %c0_4 = arith.constant 0 : index
    %5 = vector.load %arg5[%c0_3, %c0_4] : memref<8x128xf32, #tpu.memory_space<vmem>>, vector<8x128xf32>
    %c0_5 = arith.constant 0 : index
    %c0_6 = arith.constant 0 : index
    %c0_7 = arith.constant 0 : index
    %6 = vector.load %arg3[%c0_5, %c0_6, %c0_7] : memref<1x8x128xf32, #tpu.memory_space<vmem>>, vector<1x8x128xf32>
    %7 = vector.shape_cast %6 : vector<1x8x128xf32> to vector<8x128xf32>
    %8 = arith.subf %4, %7 : vector<8x128xf32>
    %9 = arith.mulf %8, %8 : vector<8x128xf32>
    %10 = arith.addf %5, %9 : vector<8x128xf32>
    %c0_8 = arith.constant 0 : index
    %c0_9 = arith.constant 0 : index
    %11 = vector.load %arg5[%c0_8, %c0_9] : memref<8x128xf32, #tpu.memory_space<vmem>>, vector<8x128xf32>
    tpu.vector_store %arg5[%c0_8, %c0_9], %10 {strides = array<i32>} : memref<8x128xf32, #tpu.memory_space<vmem>>, vector<8x128xf32>,
    %c0_i32_10 = arith.constant 0 : i32
    %12 = arith.cmpi eq, %arg1, %c0_i32_10 : i32
    %13 = arith.extui %12 : i1 to i32
    %c0_i32_11 = arith.constant 0 : i32
    %14 = arith.cmpi ne, %13, %c0_i32_11 : i32
    scf.if %14 {
      %c0_12 = arith.constant 0 : index
      %c0_13 = arith.constant 0 : index
      %15 = vector.load %arg5[%c0_12, %c0_13] : memref<8x128xf32, #tpu.memory_space<vmem>>, vector<8x128xf32>
      %cst = arith.constant dense<0.000000e+00> : vector<128xf32>
      %16 = vector.multi_reduction <add>, %15, %cst [0] : vector<8x128xf32> to vector<128xf32>
      %17 = vector.shape_cast %16 : vector<128xf32> to vector<1x128xf32>
      %18 = vector.shape_cast %17 : vector<1x128xf32> to vector<1x1x128xf32>
      %c0_14 = arith.constant 0 : index
      %c0_15 = arith.constant 0 : index
      %c0_16 = arith.constant 0 : index
      %19 = vector.load %arg4[%c0_14, %c0_15, %c0_16] : memref<1x1x128xf32, #tpu.memory_space<vmem>>, vector<1x1x128xf32>
      tpu.vector_store %arg4[%c0_14, %c0_15, %c0_16], %18 {strides = array<i32>} : memref<1x1x128xf32, #tpu.memory_space<vmem>>, vector<1x1x128xf32>,
    } else {
    }
    return
  }
  func.func @transform_0(%arg0: i32, %arg1: i32) -> (i32, i32, i32) {
    %c1_i32 = arith.constant 1 : i32
    %0 = arith.muli %arg0, %c1_i32 : i32
    %1 = arith.addi %0, %arg1 : i32
    %c0_i32 = arith.constant 0 : i32
    %c0_i32_0 = arith.constant 0 : i32
    %c0_i32_1 = arith.constant 0 : i32
    return %c0_i32, %1, %c0_i32_0 : i32, i32, i32
  }
  func.func @transform_1(%arg0: i32, %arg1: i32) -> (i32, i32, i32) {
    %c1_i32 = arith.constant 1 : i32
    %0 = arith.muli %arg0, %c1_i32 : i32
    %1 = arith.addi %0, %arg1 : i32
    %c0_i32 = arith.constant 0 : i32
    %c0_i32_0 = arith.constant 0 : i32
    %c0_i32_1 = arith.constant 0 : i32
    return %c0_i32, %1, %c0_i32_0 : i32, i32, i32
  }
  func.func @transform_2(%arg0: i32, %arg1: i32) -> (i32, i32, i32) {
    %c0_i32 = arith.constant 0 : i32
    %c0_i32_0 = arith.constant 0 : i32
    %c0_i32_1 = arith.constant 0 : i32
    return %arg0, %c0_i32, %c0_i32_0 : i32, i32, i32
  }
}

module attributes {stable_mosaic.version = 11 : i64} {
  func.func @_pool_sqdiff_kernel(%arg0: i32, %arg1: i32, %arg2: memref<16x8x128xf32, #tpu.memory_space<vmem>>, %arg3: memref<16x8x128xf32, #tpu.memory_space<vmem>>, %arg4: memref<1x1x128xf32, #tpu.memory_space<vmem>>, %arg5: memref<8x128xf32, #tpu.memory_space<vmem>>) attributes {dimension_semantics = [#tpu.dimension_semantics<parallel>, #tpu.dimension_semantics<arbitrary>], iteration_bounds = array<i64: 1, 1>, scalar_prefetch = 0 : i64, scratch_operands = 1 : i64, tpu.core_type = #tpu.core_type<tc>, window_params = [{transform_indices = @transform_0, window_bounds = array<i64: 16, 8, 128>}, {transform_indices = @transform_1, window_bounds = array<i64: 16, 8, 128>}, {transform_indices = @transform_2, window_bounds = array<i64: 1, 1, 128>}]} {
    %c0_i32 = arith.constant 0 : i32
    %0 = arith.cmpi eq, %arg1, %c0_i32 : i32
    %1 = arith.extui %0 : i1 to i32
    %c0_i32_0 = arith.constant 0 : i32
    %2 = arith.cmpi ne, %1, %c0_i32_0 : i32
    scf.if %2 {
      %cst = arith.constant 0.000000e+00 : f32
      %105 = vector.broadcast %cst : f32 to vector<8x128xf32>
      %c0_87 = arith.constant 0 : index
      %c0_88 = arith.constant 0 : index
      %106 = vector.load %arg5[%c0_87, %c0_88] : memref<8x128xf32, #tpu.memory_space<vmem>>, vector<8x128xf32>
      tpu.vector_store %arg5[%c0_87, %c0_88], %105 {strides = array<i32>} : memref<8x128xf32, #tpu.memory_space<vmem>>, vector<8x128xf32>,
    } else {
    }
    %c0 = arith.constant 0 : index
    %c0_1 = arith.constant 0 : index
    %c0_2 = arith.constant 0 : index
    %3 = vector.load %arg2[%c0, %c0_1, %c0_2] : memref<16x8x128xf32, #tpu.memory_space<vmem>>, vector<1x8x128xf32>
    %4 = vector.shape_cast %3 : vector<1x8x128xf32> to vector<8x128xf32>
    %c1 = arith.constant 1 : index
    %c0_3 = arith.constant 0 : index
    %c0_4 = arith.constant 0 : index
    %5 = vector.load %arg2[%c1, %c0_3, %c0_4] : memref<16x8x128xf32, #tpu.memory_space<vmem>>, vector<1x8x128xf32>
    %6 = vector.shape_cast %5 : vector<1x8x128xf32> to vector<8x128xf32>
    %7 = arith.maximumf %4, %6 : vector<8x128xf32>
    %c2 = arith.constant 2 : index
    %c0_5 = arith.constant 0 : index
    %c0_6 = arith.constant 0 : index
    %8 = vector.load %arg2[%c2, %c0_5, %c0_6] : memref<16x8x128xf32, #tpu.memory_space<vmem>>, vector<1x8x128xf32>
    %9 = vector.shape_cast %8 : vector<1x8x128xf32> to vector<8x128xf32>
    %10 = arith.maximumf %7, %9 : vector<8x128xf32>
    %c3 = arith.constant 3 : index
    %c0_7 = arith.constant 0 : index
    %c0_8 = arith.constant 0 : index
    %11 = vector.load %arg2[%c3, %c0_7, %c0_8] : memref<16x8x128xf32, #tpu.memory_space<vmem>>, vector<1x8x128xf32>
    %12 = vector.shape_cast %11 : vector<1x8x128xf32> to vector<8x128xf32>
    %13 = arith.maximumf %10, %12 : vector<8x128xf32>
    %c4 = arith.constant 4 : index
    %c0_9 = arith.constant 0 : index
    %c0_10 = arith.constant 0 : index
    %14 = vector.load %arg2[%c4, %c0_9, %c0_10] : memref<16x8x128xf32, #tpu.memory_space<vmem>>, vector<1x8x128xf32>
    %15 = vector.shape_cast %14 : vector<1x8x128xf32> to vector<8x128xf32>
    %16 = arith.maximumf %13, %15 : vector<8x128xf32>
    %c5 = arith.constant 5 : index
    %c0_11 = arith.constant 0 : index
    %c0_12 = arith.constant 0 : index
    %17 = vector.load %arg2[%c5, %c0_11, %c0_12] : memref<16x8x128xf32, #tpu.memory_space<vmem>>, vector<1x8x128xf32>
    %18 = vector.shape_cast %17 : vector<1x8x128xf32> to vector<8x128xf32>
    %19 = arith.maximumf %16, %18 : vector<8x128xf32>
    %c6 = arith.constant 6 : index
    %c0_13 = arith.constant 0 : index
    %c0_14 = arith.constant 0 : index
    %20 = vector.load %arg2[%c6, %c0_13, %c0_14] : memref<16x8x128xf32, #tpu.memory_space<vmem>>, vector<1x8x128xf32>
    %21 = vector.shape_cast %20 : vector<1x8x128xf32> to vector<8x128xf32>
    %22 = arith.maximumf %19, %21 : vector<8x128xf32>
    %c7 = arith.constant 7 : index
    %c0_15 = arith.constant 0 : index
    %c0_16 = arith.constant 0 : index
    %23 = vector.load %arg2[%c7, %c0_15, %c0_16] : memref<16x8x128xf32, #tpu.memory_space<vmem>>, vector<1x8x128xf32>
    %24 = vector.shape_cast %23 : vector<1x8x128xf32> to vector<8x128xf32>
    %25 = arith.maximumf %22, %24 : vector<8x128xf32>
    %c8 = arith.constant 8 : index
    %c0_17 = arith.constant 0 : index
    %c0_18 = arith.constant 0 : index
    %26 = vector.load %arg2[%c8, %c0_17, %c0_18] : memref<16x8x128xf32, #tpu.memory_space<vmem>>, vector<1x8x128xf32>
    %27 = vector.shape_cast %26 : vector<1x8x128xf32> to vector<8x128xf32>
    %28 = arith.maximumf %25, %27 : vector<8x128xf32>
    %c9 = arith.constant 9 : index
    %c0_19 = arith.constant 0 : index
    %c0_20 = arith.constant 0 : index
    %29 = vector.load %arg2[%c9, %c0_19, %c0_20] : memref<16x8x128xf32, #tpu.memory_space<vmem>>, vector<1x8x128xf32>
    %30 = vector.shape_cast %29 : vector<1x8x128xf32> to vector<8x128xf32>
    %31 = arith.maximumf %28, %30 : vector<8x128xf32>
    %c10 = arith.constant 10 : index
    %c0_21 = arith.constant 0 : index
    %c0_22 = arith.constant 0 : index
    %32 = vector.load %arg2[%c10, %c0_21, %c0_22] : memref<16x8x128xf32, #tpu.memory_space<vmem>>, vector<1x8x128xf32>
    %33 = vector.shape_cast %32 : vector<1x8x128xf32> to vector<8x128xf32>
    %34 = arith.maximumf %31, %33 : vector<8x128xf32>
    %c11 = arith.constant 11 : index
    %c0_23 = arith.constant 0 : index
    %c0_24 = arith.constant 0 : index
    %35 = vector.load %arg2[%c11, %c0_23, %c0_24] : memref<16x8x128xf32, #tpu.memory_space<vmem>>, vector<1x8x128xf32>
    %36 = vector.shape_cast %35 : vector<1x8x128xf32> to vector<8x128xf32>
    %37 = arith.maximumf %34, %36 : vector<8x128xf32>
    %c12 = arith.constant 12 : index
    %c0_25 = arith.constant 0 : index
    %c0_26 = arith.constant 0 : index
    %38 = vector.load %arg2[%c12, %c0_25, %c0_26] : memref<16x8x128xf32, #tpu.memory_space<vmem>>, vector<1x8x128xf32>
    %39 = vector.shape_cast %38 : vector<1x8x128xf32> to vector<8x128xf32>
    %40 = arith.maximumf %37, %39 : vector<8x128xf32>
    %c13 = arith.constant 13 : index
    %c0_27 = arith.constant 0 : index
    %c0_28 = arith.constant 0 : index
    %41 = vector.load %arg2[%c13, %c0_27, %c0_28] : memref<16x8x128xf32, #tpu.memory_space<vmem>>, vector<1x8x128xf32>
    %42 = vector.shape_cast %41 : vector<1x8x128xf32> to vector<8x128xf32>
    %43 = arith.maximumf %40, %42 : vector<8x128xf32>
    %c14 = arith.constant 14 : index
    %c0_29 = arith.constant 0 : index
    %c0_30 = arith.constant 0 : index
    %44 = vector.load %arg2[%c14, %c0_29, %c0_30] : memref<16x8x128xf32, #tpu.memory_space<vmem>>, vector<1x8x128xf32>
    %45 = vector.shape_cast %44 : vector<1x8x128xf32> to vector<8x128xf32>
    %46 = arith.maximumf %43, %45 : vector<8x128xf32>
    %c15 = arith.constant 15 : index
    %c0_31 = arith.constant 0 : index
    %c0_32 = arith.constant 0 : index
    %47 = vector.load %arg2[%c15, %c0_31, %c0_32] : memref<16x8x128xf32, #tpu.memory_space<vmem>>, vector<1x8x128xf32>
    %48 = vector.shape_cast %47 : vector<1x8x128xf32> to vector<8x128xf32>
    %49 = arith.maximumf %46, %48 : vector<8x128xf32>
    %c0_33 = arith.constant 0 : index
    %c0_34 = arith.constant 0 : index
    %50 = vector.load %arg5[%c0_33, %c0_34] : memref<8x128xf32, #tpu.memory_space<vmem>>, vector<8x128xf32>
    %c0_35 = arith.constant 0 : index
    %c0_36 = arith.constant 0 : index
    %c0_37 = arith.constant 0 : index
    %51 = vector.load %arg3[%c0_35, %c0_36, %c0_37] : memref<16x8x128xf32, #tpu.memory_space<vmem>>, vector<1x8x128xf32>
    %52 = vector.shape_cast %51 : vector<1x8x128xf32> to vector<8x128xf32>
    %c1_38 = arith.constant 1 : index
    %c0_39 = arith.constant 0 : index
    %c0_40 = arith.constant 0 : index
    %53 = vector.load %arg3[%c1_38, %c0_39, %c0_40] : memref<16x8x128xf32, #tpu.memory_space<vmem>>, vector<1x8x128xf32>
    %54 = vector.shape_cast %53 : vector<1x8x128xf32> to vector<8x128xf32>
    %55 = arith.maximumf %52, %54 : vector<8x128xf32>
    %c2_41 = arith.constant 2 : index
    %c0_42 = arith.constant 0 : index
    %c0_43 = arith.constant 0 : index
    %56 = vector.load %arg3[%c2_41, %c0_42, %c0_43] : memref<16x8x128xf32, #tpu.memory_space<vmem>>, vector<1x8x128xf32>
    %57 = vector.shape_cast %56 : vector<1x8x128xf32> to vector<8x128xf32>
    %58 = arith.maximumf %55, %57 : vector<8x128xf32>
    %c3_44 = arith.constant 3 : index
    %c0_45 = arith.constant 0 : index
    %c0_46 = arith.constant 0 : index
    %59 = vector.load %arg3[%c3_44, %c0_45, %c0_46] : memref<16x8x128xf32, #tpu.memory_space<vmem>>, vector<1x8x128xf32>
    %60 = vector.shape_cast %59 : vector<1x8x128xf32> to vector<8x128xf32>
    %61 = arith.maximumf %58, %60 : vector<8x128xf32>
    %c4_47 = arith.constant 4 : index
    %c0_48 = arith.constant 0 : index
    %c0_49 = arith.constant 0 : index
    %62 = vector.load %arg3[%c4_47, %c0_48, %c0_49] : memref<16x8x128xf32, #tpu.memory_space<vmem>>, vector<1x8x128xf32>
    %63 = vector.shape_cast %62 : vector<1x8x128xf32> to vector<8x128xf32>
    %64 = arith.maximumf %61, %63 : vector<8x128xf32>
    %c5_50 = arith.constant 5 : index
    %c0_51 = arith.constant 0 : index
    %c0_52 = arith.constant 0 : index
    %65 = vector.load %arg3[%c5_50, %c0_51, %c0_52] : memref<16x8x128xf32, #tpu.memory_space<vmem>>, vector<1x8x128xf32>
    %66 = vector.shape_cast %65 : vector<1x8x128xf32> to vector<8x128xf32>
    %67 = arith.maximumf %64, %66 : vector<8x128xf32>
    %c6_53 = arith.constant 6 : index
    %c0_54 = arith.constant 0 : index
    %c0_55 = arith.constant 0 : index
    %68 = vector.load %arg3[%c6_53, %c0_54, %c0_55] : memref<16x8x128xf32, #tpu.memory_space<vmem>>, vector<1x8x128xf32>
    %69 = vector.shape_cast %68 : vector<1x8x128xf32> to vector<8x128xf32>
    %70 = arith.maximumf %67, %69 : vector<8x128xf32>
    %c7_56 = arith.constant 7 : index
    %c0_57 = arith.constant 0 : index
    %c0_58 = arith.constant 0 : index
    %71 = vector.load %arg3[%c7_56, %c0_57, %c0_58] : memref<16x8x128xf32, #tpu.memory_space<vmem>>, vector<1x8x128xf32>
    %72 = vector.shape_cast %71 : vector<1x8x128xf32> to vector<8x128xf32>
    %73 = arith.maximumf %70, %72 : vector<8x128xf32>
    %c8_59 = arith.constant 8 : index
    %c0_60 = arith.constant 0 : index
    %c0_61 = arith.constant 0 : index
    %74 = vector.load %arg3[%c8_59, %c0_60, %c0_61] : memref<16x8x128xf32, #tpu.memory_space<vmem>>, vector<1x8x128xf32>
    %75 = vector.shape_cast %74 : vector<1x8x128xf32> to vector<8x128xf32>
    %76 = arith.maximumf %73, %75 : vector<8x128xf32>
    %c9_62 = arith.constant 9 : index
    %c0_63 = arith.constant 0 : index
    %c0_64 = arith.constant 0 : index
    %77 = vector.load %arg3[%c9_62, %c0_63, %c0_64] : memref<16x8x128xf32, #tpu.memory_space<vmem>>, vector<1x8x128xf32>
    %78 = vector.shape_cast %77 : vector<1x8x128xf32> to vector<8x128xf32>
    %79 = arith.maximumf %76, %78 : vector<8x128xf32>
    %c10_65 = arith.constant 10 : index
    %c0_66 = arith.constant 0 : index
    %c0_67 = arith.constant 0 : index
    %80 = vector.load %arg3[%c10_65, %c0_66, %c0_67] : memref<16x8x128xf32, #tpu.memory_space<vmem>>, vector<1x8x128xf32>
    %81 = vector.shape_cast %80 : vector<1x8x128xf32> to vector<8x128xf32>
    %82 = arith.maximumf %79, %81 : vector<8x128xf32>
    %c11_68 = arith.constant 11 : index
    %c0_69 = arith.constant 0 : index
    %c0_70 = arith.constant 0 : index
    %83 = vector.load %arg3[%c11_68, %c0_69, %c0_70] : memref<16x8x128xf32, #tpu.memory_space<vmem>>, vector<1x8x128xf32>
    %84 = vector.shape_cast %83 : vector<1x8x128xf32> to vector<8x128xf32>
    %85 = arith.maximumf %82, %84 : vector<8x128xf32>
    %c12_71 = arith.constant 12 : index
    %c0_72 = arith.constant 0 : index
    %c0_73 = arith.constant 0 : index
    %86 = vector.load %arg3[%c12_71, %c0_72, %c0_73] : memref<16x8x128xf32, #tpu.memory_space<vmem>>, vector<1x8x128xf32>
    %87 = vector.shape_cast %86 : vector<1x8x128xf32> to vector<8x128xf32>
    %88 = arith.maximumf %85, %87 : vector<8x128xf32>
    %c13_74 = arith.constant 13 : index
    %c0_75 = arith.constant 0 : index
    %c0_76 = arith.constant 0 : index
    %89 = vector.load %arg3[%c13_74, %c0_75, %c0_76] : memref<16x8x128xf32, #tpu.memory_space<vmem>>, vector<1x8x128xf32>
    %90 = vector.shape_cast %89 : vector<1x8x128xf32> to vector<8x128xf32>
    %91 = arith.maximumf %88, %90 : vector<8x128xf32>
    %c14_77 = arith.constant 14 : index
    %c0_78 = arith.constant 0 : index
    %c0_79 = arith.constant 0 : index
    %92 = vector.load %arg3[%c14_77, %c0_78, %c0_79] : memref<16x8x128xf32, #tpu.memory_space<vmem>>, vector<1x8x128xf32>
    %93 = vector.shape_cast %92 : vector<1x8x128xf32> to vector<8x128xf32>
    %94 = arith.maximumf %91, %93 : vector<8x128xf32>
    %c15_80 = arith.constant 15 : index
    %c0_81 = arith.constant 0 : index
    %c0_82 = arith.constant 0 : index
    %95 = vector.load %arg3[%c15_80, %c0_81, %c0_82] : memref<16x8x128xf32, #tpu.memory_space<vmem>>, vector<1x8x128xf32>
    %96 = vector.shape_cast %95 : vector<1x8x128xf32> to vector<8x128xf32>
    %97 = arith.maximumf %94, %96 : vector<8x128xf32>
    %98 = arith.subf %49, %97 : vector<8x128xf32>
    %99 = arith.mulf %98, %98 : vector<8x128xf32>
    %100 = arith.addf %50, %99 : vector<8x128xf32>
    %c0_83 = arith.constant 0 : index
    %c0_84 = arith.constant 0 : index
    %101 = vector.load %arg5[%c0_83, %c0_84] : memref<8x128xf32, #tpu.memory_space<vmem>>, vector<8x128xf32>
    tpu.vector_store %arg5[%c0_83, %c0_84], %100 {strides = array<i32>} : memref<8x128xf32, #tpu.memory_space<vmem>>, vector<8x128xf32>,
    %c0_i32_85 = arith.constant 0 : i32
    %102 = arith.cmpi eq, %arg1, %c0_i32_85 : i32
    %103 = arith.extui %102 : i1 to i32
    %c0_i32_86 = arith.constant 0 : i32
    %104 = arith.cmpi ne, %103, %c0_i32_86 : i32
    scf.if %104 {
      %c0_87 = arith.constant 0 : index
      %c0_88 = arith.constant 0 : index
      %105 = vector.load %arg5[%c0_87, %c0_88] : memref<8x128xf32, #tpu.memory_space<vmem>>, vector<8x128xf32>
      %cst = arith.constant dense<0.000000e+00> : vector<128xf32>
      %106 = vector.multi_reduction <add>, %105, %cst [0] : vector<8x128xf32> to vector<128xf32>
      %107 = vector.shape_cast %106 : vector<128xf32> to vector<1x128xf32>
      %108 = vector.shape_cast %107 : vector<1x128xf32> to vector<1x1x128xf32>
      %c0_89 = arith.constant 0 : index
      %c0_90 = arith.constant 0 : index
      %c0_91 = arith.constant 0 : index
      %109 = vector.load %arg4[%c0_89, %c0_90, %c0_91] : memref<1x1x128xf32, #tpu.memory_space<vmem>>, vector<1x1x128xf32>
      tpu.vector_store %arg4[%c0_89, %c0_90, %c0_91], %108 {strides = array<i32>} : memref<1x1x128xf32, #tpu.memory_space<vmem>>, vector<1x1x128xf32>,
    } else {
    }
    return
  }
  func.func @transform_0(%arg0: i32, %arg1: i32) -> (i32, i32, i32) {
    %c1_i32 = arith.constant 1 : i32
    %0 = arith.muli %arg0, %c1_i32 : i32
    %1 = arith.addi %0, %arg1 : i32
    %c0_i32 = arith.constant 0 : i32
    %c0_i32_0 = arith.constant 0 : i32
    %c0_i32_1 = arith.constant 0 : i32
    return %c0_i32, %1, %c0_i32_0 : i32, i32, i32
  }
  func.func @transform_1(%arg0: i32, %arg1: i32) -> (i32, i32, i32) {
    %c1_i32 = arith.constant 1 : i32
    %0 = arith.muli %arg0, %c1_i32 : i32
    %1 = arith.addi %0, %arg1 : i32
    %c0_i32 = arith.constant 0 : i32
    %c0_i32_0 = arith.constant 0 : i32
    %c0_i32_1 = arith.constant 0 : i32
    return %c0_i32, %1, %c0_i32_0 : i32, i32, i32
  }
  func.func @transform_2(%arg0: i32, %arg1: i32) -> (i32, i32, i32) {
    %c0_i32 = arith.constant 0 : i32
    %c0_i32_0 = arith.constant 0 : i32
    %c0_i32_1 = arith.constant 0 : i32
    return %arg0, %c0_i32, %c0_i32_0 : i32, i32, i32
  }
}

</mosaic_0001>

<llo_original>
// kernel: custom_loss.8
$region0: #{custom_loss.8}
  #allocation0 [shape = 'u32[]', space=smem, size = 0x4, offset = 0x4, fixed_abs, tag = 'smem constant byte address 0x4 - core index']
  #allocation1 [shape = 'u32[144,128]{1,0:T(1,128)}', space=vmem, size = 0x12000, scoped, tag = 'internal scratch']
  #allocation2 [shape = 'f32[8,128]{1,0:T(8,128)}', space=vmem, size = 0x1000, scoped, tag = 'scratch operand']
  %s0 = inlined_call_operand.vmem [shape: f32[4,8,128], index: 0, kind: input, shape index: {}]
  %s1 = inlined_call_operand.vmem [shape: f32[4,8,128], index: 1, kind: input, shape index: {}]
  %s2 = inlined_call_operand.vmem [shape: f32[4,8,128], index: 2, kind: input, shape index: {}]
  %s3 = inlined_call_operand.vmem [shape: f32[1,1,128], index: 3, kind: output, shape index: {}]
  %s4 = sld [smem:[#allocation0]]
  $region30: #{custom_loss.8} parent=0
    _
  %s6 = ssub.s32 1, %s4
  %s7 = scalar_select 0, %s6, %s4
  // Predicated region
  $region2: #{custom_loss.8} parent=0 // pred_check
    _
  $region3: #{custom_loss.8} parent=0 // pred_check_branch
    %9 = sbr.rel (0) target = $region5
  $region4: #{custom_loss.8} parent=0 // pred_region
    %s10 = sadd.s32 0, 0
    %p11 = scmp.lt.s32.totalorder %s10, 0
    %s12 = scalar_select %p11, %s10, 0
    %s13 = smul.addr %s12, 8
    %s14 = scalar_lea.vmem %s0, %s13
    %s15 = sadd.s32 0, 0
  $region5: #{custom_loss.8} parent=0 // pred_fallthru
    _
  // Predicated region
  $region6: #{custom_loss.8} parent=0 // pred_check
    _
  $region7: #{custom_loss.8} parent=0 // pred_check_branch
    %17 = sbr.rel (0) target = $region9
  $region8: #{custom_loss.8} parent=0 // pred_region
    %s18 = sadd.s32 0, 0
    %p19 = scmp.lt.s32.totalorder %s18, 0
    %s20 = scalar_select %p19, %s18, 0
    %s21 = smul.addr %s20, 8
    %s22 = scalar_lea.vmem %s1, %s21
    %s23 = sadd.s32 0, 0
  $region9: #{custom_loss.8} parent=0 // pred_fallthru
    _
  // Predicated region
  $region10: #{custom_loss.8} parent=0 // pred_check
    _
  $region11: #{custom_loss.8} parent=0 // pred_check_branch
    %25 = sbr.rel (0) target = $region13
  $region12: #{custom_loss.8} parent=0 // pred_region
    %s26 = sadd.s32 0, 0
    %p27 = scmp.lt.s32.totalorder %s26, 0
    %s28 = scalar_select %p27, %s26, 0
    %s29 = smul.addr %s28, 8
    %s30 = scalar_lea.vmem %s2, %s29
    %s31 = sadd.s32 0, 0
  $region13: #{custom_loss.8} parent=0 // pred_fallthru
    _
  %s32 = sadd.s32 0, 0
  %p33 = scmp.lt.s32.totalorder %s32, 0
  %s34 = scalar_select %p33, %s32, 0
  %s35 = smul.addr %s34, 8
  %s36 = scalar_lea.vmem %s0, %s35
  %s37 = sadd.s32 0, 0
  %p38 = scmp.lt.s32.totalorder %s37, 0
  %s39 = scalar_select %p38, %s37, 0
  %s40 = smul.addr %s39, 8
  %s41 = scalar_lea.vmem %s1, %s40
  %s42 = sadd.s32 0, 0
  %p43 = scmp.lt.s32.totalorder %s42, 0
  %s44 = scalar_select %p43, %s42, 0
  %s45 = smul.addr %s44, 8
  %s46 = scalar_lea.vmem %s2, %s45
  %s47 = sadd.s32 0, 0
  %p48 = scmp.lt.s32.totalorder %s47, 0
  %s49 = scalar_select %p48, %s47, 0
  %s50 = smul.addr %s49, 8
  %s51 = scalar_lea.vmem %s0, %s50
  %s52 = sadd.s32 0, 0
  %s53 = sadd.s32 0, 0
  %p54 = scmp.lt.s32.totalorder %s53, 0
  %s55 = scalar_select %p54, %s53, 0
  %s56 = smul.addr %s55, 8
  %s57 = scalar_lea.vmem %s1, %s56
  %s58 = sadd.s32 0, 0
  %s59 = sadd.s32 0, 0
  %p60 = scmp.lt.s32.totalorder %s59, 0
  %s61 = scalar_select %p60, %s59, 0
  %s62 = smul.addr %s61, 8
  %s63 = scalar_lea.vmem %s2, %s62
  %s64 = sadd.s32 0, 0
  %p65 = scmp.eq.s32.totalorder 0, 0
  // Predicated region
  $region14: #{custom_loss.8} parent=0 // pred_check
    %p66 = pneg %p65
  $region15: #{custom_loss.8} parent=0 // pred_check_branch
    %68 = sbr.rel (%p66) target = $region17
  $region16: #{custom_loss.8} parent=0 // pred_region
    %69 = vst [vmem:[#allocation2] sm:$0xff] 0.0
  $region17: #{custom_loss.8} parent=0 // pred_fallthru
    _
  %v70 = vld [vmem:[%s51] sm:$0xff]
  %s71 = scalar_lea.vmem %s51, 8
  %v72 = vld [vmem:[%s71] sm:$0xff]
  %v73 = vmax.f32 %v70, %v72
  %s74 = scalar_lea.vmem %s51, 16
  %v75 = vld [vmem:[%s74] sm:$0xff]
  %v76 = vmax.f32 %v73, %v75
  %s77 = scalar_lea.vmem %s51, 24
  %v78 = vld [vmem:[%s77] sm:$0xff]
  %v79 = vmax.f32 %v76, %v78
  %v80 = vld [vmem:[#allocation2] sm:$0xff]
  %v81 = vld [vmem:[%s57] sm:$0xff]
  %s82 = scalar_lea.vmem %s57, 8
  %v83 = vld [vmem:[%s82] sm:$0xff]
  %v84 = vmax.f32 %v81, %v83
  %s85 = scalar_lea.vmem %s57, 16
  %v86 = vld [vmem:[%s85] sm:$0xff]
  %v87 = vmax.f32 %v84, %v86
  %s88 = scalar_lea.vmem %s57, 24
  %v89 = vld [vmem:[%s88] sm:$0xff]
  %v90 = vmax.f32 %v87, %v89
  %v91 = vsub.f32 %v79, %v90
  %v92 = vmul.f32 %v91, %v91
  %v93 = vadd.f32 %v80, %v92
  %v94 = vld [vmem:[%s63] sm:$0xff]
  %s95 = scalar_lea.vmem %s63, 8
  %v96 = vld [vmem:[%s95] sm:$0xff]
  %v97 = vmax.f32 %v94, %v96
  %s98 = scalar_lea.vmem %s63, 16
  %v99 = vld [vmem:[%s98] sm:$0xff]
  %v100 = vmax.f32 %v97, %v99
  %s101 = scalar_lea.vmem %s63, 24
  %v102 = vld [vmem:[%s101] sm:$0xff]
  %v103 = vmax.f32 %v100, %v102
  %v104 = vsub.f32 %v79, %v103
  %v105 = vmul.f32 %v104, %v104
  %v106 = vadd.f32 %v93, %v105
  %107 = vst [vmem:[#allocation2] sm:$0xff] %v106
  // Predicated region
  $region18: #{custom_loss.8} parent=0 // pred_check
    %p108 = pneg %p65
  $region19: #{custom_loss.8} parent=0 // pred_check_branch
    %110 = sbr.rel (%p108) target = $region21
  $region20: #{custom_loss.8} parent=0 // pred_region
    %v111 = vld [vmem:[#allocation2] sm:$0xff]
    %v112 = vrot.slane %v111, 4
    %v113 = vadd.f32 %v111, %v112
    %v114 = vrot.slane %v113, 2
    %v115 = vadd.f32 %v113, %v114
    %v116 = vrot.slane %v115, 1
    %v117 = vadd.f32 %v115, %v116
    %118 = vst [vmem:[%s3] sm:$0x1] %v117
  $region21: #{custom_loss.8} parent=0 // pred_fallthru
    _
  // Predicated region
  $region22: #{custom_loss.8} parent=0 // pred_check
    _
  $region23: #{custom_loss.8} parent=0 // pred_check_branch
    %120 = sbr.rel (0) target = $region25
  $region24: #{custom_loss.8} parent=0 // pred_region
    _
  $region25: #{custom_loss.8} parent=0 // pred_fallthru
    _
  // Predicated region
  $region26: #{custom_loss.8} parent=0 // pred_check
    _
  $region27: #{custom_loss.8} parent=0 // pred_check_branch
    %122 = sbr.rel (0) target = $region29
  $region28: #{custom_loss.8} parent=0 // pred_region
    _
  $region29: #{custom_loss.8} parent=0 // pred_fallthru
    _

// kernel: custom_loss.6
$region0: #{custom_loss.6}
  #allocation0 [shape = 'u32[]', space=smem, size = 0x4, offset = 0x4, fixed_abs, tag = 'smem constant byte address 0x4 - core index']
  #allocation1 [shape = 'u32[144,128]{1,0:T(1,128)}', space=vmem, size = 0x12000, scoped, tag = 'internal scratch']
  #allocation2 [shape = 'f32[16,128]{1,0:T(8,128)}', space=vmem, size = 0x2000, scoped, tag = 'scratch operand']
  %s0 = inlined_call_operand.vmem [shape: f32[1,16,128], index: 0, kind: input, shape index: {}]
  %s1 = inlined_call_operand.vmem [shape: f32[1,16,128], index: 1, kind: input, shape index: {}]
  %s2 = inlined_call_operand.vmem [shape: f32[1,16,128], index: 2, kind: input, shape index: {}]
  %s3 = inlined_call_operand.vmem [shape: f32[1,1,128], index: 3, kind: output, shape index: {}]
  %s4 = sld [smem:[#allocation0]]
  $region30: #{custom_loss.6} parent=0
    _
  %s6 = ssub.s32 1, %s4
  %s7 = scalar_select 0, %s6, %s4
  // Predicated region
  $region2: #{custom_loss.6} parent=0 // pred_check
    _
  $region3: #{custom_loss.6} parent=0 // pred_check_branch
    %9 = sbr.rel (0) target = $region5
  $region4: #{custom_loss.6} parent=0 // pred_region
    %s10 = sadd.s32 0, 0
    %s11 = smul.u32 2, %s10
    %p12 = scmp.lt.s32.totalorder %s11, 1
    %s13 = scalar_select %p12, %s11, 1
    %s14 = smul.addr %s13, 8
    %s15 = scalar_lea.vmem %s0, %s14
    %s16 = sadd.s32 0, 0
    %s17 = smul.u32 2, %s16
  $region5: #{custom_loss.6} parent=0 // pred_fallthru
    _
  // Predicated region
  $region6: #{custom_loss.6} parent=0 // pred_check
    _
  $region7: #{custom_loss.6} parent=0 // pred_check_branch
    %19 = sbr.rel (0) target = $region9
  $region8: #{custom_loss.6} parent=0 // pred_region
    %s20 = sadd.s32 0, 0
    %s21 = smul.u32 2, %s20
    %p22 = scmp.lt.s32.totalorder %s21, 1
    %s23 = scalar_select %p22, %s21, 1
    %s24 = smul.addr %s23, 8
    %s25 = scalar_lea.vmem %s1, %s24
    %s26 = sadd.s32 0, 0
    %s27 = smul.u32 2, %s26
  $region9: #{custom_loss.6} parent=0 // pred_fallthru
    _
  // Predicated region
  $region10: #{custom_loss.6} parent=0 // pred_check
    _
  $region11: #{custom_loss.6} parent=0 // pred_check_branch
    %29 = sbr.rel (0) target = $region13
  $region12: #{custom_loss.6} parent=0 // pred_region
    %s30 = sadd.s32 0, 0
    %s31 = smul.u32 2, %s30
    %p32 = scmp.lt.s32.totalorder %s31, 1
    %s33 = scalar_select %p32, %s31, 1
    %s34 = smul.addr %s33, 8
    %s35 = scalar_lea.vmem %s2, %s34
    %s36 = sadd.s32 0, 0
    %s37 = smul.u32 2, %s36
  $region13: #{custom_loss.6} parent=0 // pred_fallthru
    _
  %s38 = sadd.s32 0, 0
  %s39 = smul.u32 2, %s38
  %p40 = scmp.lt.s32.totalorder %s39, 1
  %s41 = scalar_select %p40, %s39, 1
  %s42 = smul.addr %s41, 8
  %s43 = scalar_lea.vmem %s0, %s42
  %s44 = sadd.s32 0, 0
  %s45 = smul.u32 2, %s44
  %p46 = scmp.lt.s32.totalorder %s45, 1
  %s47 = scalar_select %p46, %s45, 1
  %s48 = smul.addr %s47, 8
  %s49 = scalar_lea.vmem %s1, %s48
  %s50 = sadd.s32 0, 0
  %s51 = smul.u32 2, %s50
  %p52 = scmp.lt.s32.totalorder %s51, 1
  %s53 = scalar_select %p52, %s51, 1
  %s54 = smul.addr %s53, 8
  %s55 = scalar_lea.vmem %s2, %s54
  %s56 = sadd.s32 0, 0
  %s57 = smul.u32 2, %s56
  %p58 = scmp.lt.s32.totalorder %s57, 1
  %s59 = scalar_select %p58, %s57, 1
  %s60 = smul.addr %s59, 8
  %s61 = scalar_lea.vmem %s0, %s60
  %s62 = sadd.s32 0, 0
  %s63 = smul.u32 2, %s62
  %s64 = sadd.s32 0, 0
  %s65 = smul.u32 2, %s64
  %p66 = scmp.lt.s32.totalorder %s65, 1
  %s67 = scalar_select %p66, %s65, 1
  %s68 = smul.addr %s67, 8
  %s69 = scalar_lea.vmem %s1, %s68
  %s70 = sadd.s32 0, 0
  %s71 = smul.u32 2, %s70
  %s72 = sadd.s32 0, 0
  %s73 = smul.u32 2, %s72
  %p74 = scmp.lt.s32.totalorder %s73, 1
  %s75 = scalar_select %p74, %s73, 1
  %s76 = smul.addr %s75, 8
  %s77 = scalar_lea.vmem %s2, %s76
  %s78 = sadd.s32 0, 0
  %s79 = smul.u32 2, %s78
  %p80 = scmp.eq.s32.totalorder 0, 0
  // Predicated region
  $region14: #{custom_loss.6} parent=0 // pred_check
    %p81 = pneg %p80
  $region15: #{custom_loss.6} parent=0 // pred_check_branch
    %83 = sbr.rel (%p81) target = $region17
  $region16: #{custom_loss.6} parent=0 // pred_region
    %84 = vst [vmem:[#allocation2] sm:$0xff] 0.0
    %85 = vst [vmem:[#allocation2 + $0x8] sm:$0xff] 0.0
  $region17: #{custom_loss.6} parent=0 // pred_fallthru
    _
  %v86 = vld [vmem:[%s61] sm:$0xff]
  %v87 = vld [vmem:[%s61 + $0x8] sm:$0xff]
  %v88 = vld [vmem:[#allocation2] sm:$0xff]
  %v89 = vld [vmem:[#allocation2 + $0x8] sm:$0xff]
  %v90 = vld [vmem:[%s69] sm:$0xff]
  %v91 = vld [vmem:[%s69 + $0x8] sm:$0xff]
  %v92 = vsub.f32 %v86, %v90
  %v93 = vsub.f32 %v87, %v91
  %v94 = vmul.f32 %v92, %v92
  %v95 = vmul.f32 %v93, %v93
  %v96 = vadd.f32 %v88, %v94
  %v97 = vadd.f32 %v89, %v95
  %v98 = vld [vmem:[%s77] sm:$0xff]
  %v99 = vld [vmem:[%s77 + $0x8] sm:$0xff]
  %v100 = vsub.f32 %v86, %v98
  %v101 = vsub.f32 %v87, %v99
  %v102 = vmul.f32 %v100, %v100
  %v103 = vmul.f32 %v101, %v101
  %v104 = vadd.f32 %v96, %v102
  %v105 = vadd.f32 %v97, %v103
  %106 = vst [vmem:[#allocation2] sm:$0xff] %v104
  %107 = vst [vmem:[#allocation2 + $0x8] sm:$0xff] %v105
  // Predicated region
  $region18: #{custom_loss.6} parent=0 // pred_check
    %p108 = pneg %p80
  $region19: #{custom_loss.6} parent=0 // pred_check_branch
    %110 = sbr.rel (%p108) target = $region21
  $region20: #{custom_loss.6} parent=0 // pred_region
    %v111 = vld [vmem:[#allocation2] sm:$0xff]
    %v112 = vld [vmem:[#allocation2 + $0x8] sm:$0xff]
    %v113 = vadd.f32 %v111, %v112
    %v114 = vrot.slane %v113, 4
    %v115 = vadd.f32 %v113, %v114
    %v116 = vrot.slane %v115, 2
    %v117 = vadd.f32 %v115, %v116
    %v118 = vrot.slane %v117, 1
    %v119 = vadd.f32 %v117, %v118
    %120 = vst [vmem:[%s3] sm:$0x1] %v119
  $region21: #{custom_loss.6} parent=0 // pred_fallthru
    _
  // Predicated region
  $region22: #{custom_loss.6} parent=0 // pred_check
    _
  $region23: #{custom_loss.6} parent=0 // pred_check_branch
    %122 = sbr.rel (0) target = $region25
  $region24: #{custom_loss.6} parent=0 // pred_region
    _
  $region25: #{custom_loss.6} parent=0 // pred_fallthru
    _
  // Predicated region
  $region26: #{custom_loss.6} parent=0 // pred_check
    _
  $region27: #{custom_loss.6} parent=0 // pred_check_branch
    %124 = sbr.rel (0) target = $region29
  $region28: #{custom_loss.6} parent=0 // pred_region
    _
  $region29: #{custom_loss.6} parent=0 // pred_fallthru
    _

// kernel: custom_loss.10
$region0: #{custom_loss.10}
  #allocation0 [shape = 'u32[]', space=smem, size = 0x4, offset = 0x4, fixed_abs, tag = 'smem constant byte address 0x4 - core index']
  #allocation1 [shape = 'u32[144,128]{1,0:T(1,128)}', space=vmem, size = 0x12000, scoped, tag = 'internal scratch']
  #allocation2 [shape = 'f32[8,128]{1,0:T(8,128)}', space=vmem, size = 0x1000, scoped, tag = 'scratch operand']
  %s0 = inlined_call_operand.vmem [shape: f32[16,8,128], index: 0, kind: input, shape index: {}]
  %s1 = inlined_call_operand.vmem [shape: f32[16,8,128], index: 1, kind: input, shape index: {}]
  %s2 = inlined_call_operand.vmem [shape: f32[16,8,128], index: 2, kind: input, shape index: {}]
  %s3 = inlined_call_operand.vmem [shape: f32[1,1,128], index: 3, kind: output, shape index: {}]
  %s4 = sld [smem:[#allocation0]]
  $region30: #{custom_loss.10} parent=0
    _
  %s6 = ssub.s32 1, %s4
  %s7 = scalar_select 0, %s6, %s4
  // Predicated region
  $region2: #{custom_loss.10} parent=0 // pred_check
    _
  $region3: #{custom_loss.10} parent=0 // pred_check_branch
    %9 = sbr.rel (0) target = $region5
  $region4: #{custom_loss.10} parent=0 // pred_region
    %s10 = sadd.s32 0, 0
    %p11 = scmp.lt.s32.totalorder %s10, 0
    %s12 = scalar_select %p11, %s10, 0
    %s13 = smul.addr %s12, 8
    %s14 = scalar_lea.vmem %s0, %s13
    %s15 = sadd.s32 0, 0
  $region5: #{custom_loss.10} parent=0 // pred_fallthru
    _
  // Predicated region
  $region6: #{custom_loss.10} parent=0 // pred_check
    _
  $region7: #{custom_loss.10} parent=0 // pred_check_branch
    %17 = sbr.rel (0) target = $region9
  $region8: #{custom_loss.10} parent=0 // pred_region
    %s18 = sadd.s32 0, 0
    %p19 = scmp.lt.s32.totalorder %s18, 0
    %s20 = scalar_select %p19, %s18, 0
    %s21 = smul.addr %s20, 8
    %s22 = scalar_lea.vmem %s1, %s21
    %s23 = sadd.s32 0, 0
  $region9: #{custom_loss.10} parent=0 // pred_fallthru
    _
  // Predicated region
  $region10: #{custom_loss.10} parent=0 // pred_check
    _
  $region11: #{custom_loss.10} parent=0 // pred_check_branch
    %25 = sbr.rel (0) target = $region13
  $region12: #{custom_loss.10} parent=0 // pred_region
    %s26 = sadd.s32 0, 0
    %p27 = scmp.lt.s32.totalorder %s26, 0
    %s28 = scalar_select %p27, %s26, 0
    %s29 = smul.addr %s28, 8
    %s30 = scalar_lea.vmem %s2, %s29
    %s31 = sadd.s32 0, 0
  $region13: #{custom_loss.10} parent=0 // pred_fallthru
    _
  %s32 = sadd.s32 0, 0
  %p33 = scmp.lt.s32.totalorder %s32, 0
  %s34 = scalar_select %p33, %s32, 0
  %s35 = smul.addr %s34, 8
  %s36 = scalar_lea.vmem %s0, %s35
  %s37 = sadd.s32 0, 0
  %p38 = scmp.lt.s32.totalorder %s37, 0
  %s39 = scalar_select %p38, %s37, 0
  %s40 = smul.addr %s39, 8
  %s41 = scalar_lea.vmem %s1, %s40
  %s42 = sadd.s32 0, 0
  %p43 = scmp.lt.s32.totalorder %s42, 0
  %s44 = scalar_select %p43, %s42, 0
  %s45 = smul.addr %s44, 8
  %s46 = scalar_lea.vmem %s2, %s45
  %s47 = sadd.s32 0, 0
  %p48 = scmp.lt.s32.totalorder %s47, 0
  %s49 = scalar_select %p48, %s47, 0
  %s50 = smul.addr %s49, 8
  %s51 = scalar_lea.vmem %s0, %s50
  %s52 = sadd.s32 0, 0
  %s53 = sadd.s32 0, 0
  %p54 = scmp.lt.s32.totalorder %s53, 0
  %s55 = scalar_select %p54, %s53, 0
  %s56 = smul.addr %s55, 8
  %s57 = scalar_lea.vmem %s1, %s56
  %s58 = sadd.s32 0, 0
  %s59 = sadd.s32 0, 0
  %p60 = scmp.lt.s32.totalorder %s59, 0
  %s61 = scalar_select %p60, %s59, 0
  %s62 = smul.addr %s61, 8
  %s63 = scalar_lea.vmem %s2, %s62
  %s64 = sadd.s32 0, 0
  %p65 = scmp.eq.s32.totalorder 0, 0
  // Predicated region
  $region14: #{custom_loss.10} parent=0 // pred_check
    %p66 = pneg %p65
  $region15: #{custom_loss.10} parent=0 // pred_check_branch
    %68 = sbr.rel (%p66) target = $region17
  $region16: #{custom_loss.10} parent=0 // pred_region
    %69 = vst [vmem:[#allocation2] sm:$0xff] 0.0
  $region17: #{custom_loss.10} parent=0 // pred_fallthru
    _
  %v70 = vld [vmem:[%s51] sm:$0xff]
  %s71 = scalar_lea.vmem %s51, 8
  %v72 = vld [vmem:[%s71] sm:$0xff]
  %v73 = vmax.f32 %v70, %v72
  %s74 = scalar_lea.vmem %s51, 16
  %v75 = vld [vmem:[%s74] sm:$0xff]
  %v76 = vmax.f32 %v73, %v75
  %s77 = scalar_lea.vmem %s51, 24
  %v78 = vld [vmem:[%s77] sm:$0xff]
  %v79 = vmax.f32 %v76, %v78
  %s80 = scalar_lea.vmem %s51, 32
  %v81 = vld [vmem:[%s80] sm:$0xff]
  %v82 = vmax.f32 %v79, %v81
  %s83 = scalar_lea.vmem %s51, 40
  %v84 = vld [vmem:[%s83] sm:$0xff]
  %v85 = vmax.f32 %v82, %v84
  %s86 = scalar_lea.vmem %s51, 48
  %v87 = vld [vmem:[%s86] sm:$0xff]
  %v88 = vmax.f32 %v85, %v87
  %s89 = scalar_lea.vmem %s51, 56
  %v90 = vld [vmem:[%s89] sm:$0xff]
  %v91 = vmax.f32 %v88, %v90
  %s92 = scalar_lea.vmem %s51, 64
  %v93 = vld [vmem:[%s92] sm:$0xff]
  %v94 = vmax.f32 %v91, %v93
  %s95 = scalar_lea.vmem %s51, 72
  %v96 = vld [vmem:[%s95] sm:$0xff]
  %v97 = vmax.f32 %v94, %v96
  %s98 = scalar_lea.vmem %s51, 80
  %v99 = vld [vmem:[%s98] sm:$0xff]
  %v100 = vmax.f32 %v97, %v99
  %s101 = scalar_lea.vmem %s51, 88
  %v102 = vld [vmem:[%s101] sm:$0xff]
  %v103 = vmax.f32 %v100, %v102
  %s104 = scalar_lea.vmem %s51, 96
  %v105 = vld [vmem:[%s104] sm:$0xff]
  %v106 = vmax.f32 %v103, %v105
  %s107 = scalar_lea.vmem %s51, 104
  %v108 = vld [vmem:[%s107] sm:$0xff]
  %v109 = vmax.f32 %v106, %v108
  %s110 = scalar_lea.vmem %s51, 112
  %v111 = vld [vmem:[%s110] sm:$0xff]
  %v112 = vmax.f32 %v109, %v111
  %s113 = scalar_lea.vmem %s51, 120
  %v114 = vld [vmem:[%s113] sm:$0xff]
  %v115 = vmax.f32 %v112, %v114
  %v116 = vld [vmem:[#allocation2] sm:$0xff]
  %v117 = vld [vmem:[%s57] sm:$0xff]
  %s118 = scalar_lea.vmem %s57, 8
  %v119 = vld [vmem:[%s118] sm:$0xff]
  %v120 = vmax.f32 %v117, %v119
  %s121 = scalar_lea.vmem %s57, 16
  %v122 = vld [vmem:[%s121] sm:$0xff]
  %v123 = vmax.f32 %v120, %v122
  %s124 = scalar_lea.vmem %s57, 24
  %v125 = vld [vmem:[%s124] sm:$0xff]
  %v126 = vmax.f32 %v123, %v125
  %s127 = scalar_lea.vmem %s57, 32
  %v128 = vld [vmem:[%s127] sm:$0xff]
  %v129 = vmax.f32 %v126, %v128
  %s130 = scalar_lea.vmem %s57, 40
  %v131 = vld [vmem:[%s130] sm:$0xff]
  %v132 = vmax.f32 %v129, %v131
  %s133 = scalar_lea.vmem %s57, 48
  %v134 = vld [vmem:[%s133] sm:$0xff]
  %v135 = vmax.f32 %v132, %v134
  %s136 = scalar_lea.vmem %s57, 56
  %v137 = vld [vmem:[%s136] sm:$0xff]
  %v138 = vmax.f32 %v135, %v137
  %s139 = scalar_lea.vmem %s57, 64
  %v140 = vld [vmem:[%s139] sm:$0xff]
  %v141 = vmax.f32 %v138, %v140
  %s142 = scalar_lea.vmem %s57, 72
  %v143 = vld [vmem:[%s142] sm:$0xff]
  %v144 = vmax.f32 %v141, %v143
  %s145 = scalar_lea.vmem %s57, 80
  %v146 = vld [vmem:[%s145] sm:$0xff]
  %v147 = vmax.f32 %v144, %v146
  %s148 = scalar_lea.vmem %s57, 88
  %v149 = vld [vmem:[%s148] sm:$0xff]
  %v150 = vmax.f32 %v147, %v149
  %s151 = scalar_lea.vmem %s57, 96
  %v152 = vld [vmem:[%s151] sm:$0xff]
  %v153 = vmax.f32 %v150, %v152
  %s154 = scalar_lea.vmem %s57, 104
  %v155 = vld [vmem:[%s154] sm:$0xff]
  %v156 = vmax.f32 %v153, %v155
  %s157 = scalar_lea.vmem %s57, 112
  %v158 = vld [vmem:[%s157] sm:$0xff]
  %v159 = vmax.f32 %v156, %v158
  %s160 = scalar_lea.vmem %s57, 120
  %v161 = vld [vmem:[%s160] sm:$0xff]
  %v162 = vmax.f32 %v159, %v161
  %v163 = vsub.f32 %v115, %v162
  %v164 = vmul.f32 %v163, %v163
  %v165 = vadd.f32 %v116, %v164
  %v166 = vld [vmem:[%s63] sm:$0xff]
  %s167 = scalar_lea.vmem %s63, 8
  %v168 = vld [vmem:[%s167] sm:$0xff]
  %v169 = vmax.f32 %v166, %v168
  %s170 = scalar_lea.vmem %s63, 16
  %v171 = vld [vmem:[%s170] sm:$0xff]
  %v172 = vmax.f32 %v169, %v171
  %s173 = scalar_lea.vmem %s63, 24
  %v174 = vld [vmem:[%s173] sm:$0xff]
  %v175 = vmax.f32 %v172, %v174
  %s176 = scalar_lea.vmem %s63, 32
  %v177 = vld [vmem:[%s176] sm:$0xff]
  %v178 = vmax.f32 %v175, %v177
  %s179 = scalar_lea.vmem %s63, 40
  %v180 = vld [vmem:[%s179] sm:$0xff]
  %v181 = vmax.f32 %v178, %v180
  %s182 = scalar_lea.vmem %s63, 48
  %v183 = vld [vmem:[%s182] sm:$0xff]
  %v184 = vmax.f32 %v181, %v183
  %s185 = scalar_lea.vmem %s63, 56
  %v186 = vld [vmem:[%s185] sm:$0xff]
  %v187 = vmax.f32 %v184, %v186
  %s188 = scalar_lea.vmem %s63, 64
  %v189 = vld [vmem:[%s188] sm:$0xff]
  %v190 = vmax.f32 %v187, %v189
  %s191 = scalar_lea.vmem %s63, 72
  %v192 = vld [vmem:[%s191] sm:$0xff]
  %v193 = vmax.f32 %v190, %v192
  %s194 = scalar_lea.vmem %s63, 80
  %v195 = vld [vmem:[%s194] sm:$0xff]
  %v196 = vmax.f32 %v193, %v195
  %s197 = scalar_lea.vmem %s63, 88
  %v198 = vld [vmem:[%s197] sm:$0xff]
  %v199 = vmax.f32 %v196, %v198
  %s200 = scalar_lea.vmem %s63, 96
  %v201 = vld [vmem:[%s200] sm:$0xff]
  %v202 = vmax.f32 %v199, %v201
  %s203 = scalar_lea.vmem %s63, 104
  %v204 = vld [vmem:[%s203] sm:$0xff]
  %v205 = vmax.f32 %v202, %v204
  %s206 = scalar_lea.vmem %s63, 112
  %v207 = vld [vmem:[%s206] sm:$0xff]
  %v208 = vmax.f32 %v205, %v207
  %s209 = scalar_lea.vmem %s63, 120
  %v210 = vld [vmem:[%s209] sm:$0xff]
  %v211 = vmax.f32 %v208, %v210
  %v212 = vsub.f32 %v115, %v211
  %v213 = vmul.f32 %v212, %v212
  %v214 = vadd.f32 %v165, %v213
  %215 = vst [vmem:[#allocation2] sm:$0xff] %v214
  // Predicated region
  $region18: #{custom_loss.10} parent=0 // pred_check
    %p216 = pneg %p65
  $region19: #{custom_loss.10} parent=0 // pred_check_branch
    %218 = sbr.rel (%p216) target = $region21
  $region20: #{custom_loss.10} parent=0 // pred_region
    %v219 = vld [vmem:[#allocation2] sm:$0xff]
    %v220 = vrot.slane %v219, 4
    %v221 = vadd.f32 %v219, %v220
    %v222 = vrot.slane %v221, 2
    %v223 = vadd.f32 %v221, %v222
    %v224 = vrot.slane %v223, 1
    %v225 = vadd.f32 %v223, %v224
    %226 = vst [vmem:[%s3] sm:$0x1] %v225
  $region21: #{custom_loss.10} parent=0 // pred_fallthru
    _
  // Predicated region
  $region22: #{custom_loss.10} parent=0 // pred_check
    _
  $region23: #{custom_loss.10} parent=0 // pred_check_branch
    %228 = sbr.rel (0) target = $region25
  $region24: #{custom_loss.10} parent=0 // pred_region
    _
  $region25: #{custom_loss.10} parent=0 // pred_fallthru
    _
  // Predicated region
  $region26: #{custom_loss.10} parent=0 // pred_check
    _
  $region27: #{custom_loss.10} parent=0 // pred_check_branch
    %230 = sbr.rel (0) target = $region29
  $region28: #{custom_loss.10} parent=0 // pred_region
    _
  $region29: #{custom_loss.10} parent=0 // pred_fallthru
    _

// kernel: custom_loss.9
$region0: #{custom_loss.9}
  #allocation0 [shape = 'u32[]', space=smem, size = 0x4, offset = 0x4, fixed_abs, tag = 'smem constant byte address 0x4 - core index']
  #allocation1 [shape = 'u32[144,128]{1,0:T(1,128)}', space=vmem, size = 0x12000, scoped, tag = 'internal scratch']
  #allocation2 [shape = 'f32[8,128]{1,0:T(8,128)}', space=vmem, size = 0x1000, scoped, tag = 'scratch operand']
  %s0 = inlined_call_operand.vmem [shape: f32[4,8,128], index: 0, kind: input, shape index: {}]
  %s1 = inlined_call_operand.vmem [shape: f32[4,8,128], index: 1, kind: input, shape index: {}]
  %s2 = inlined_call_operand.vmem [shape: f32[1,1,128], index: 2, kind: output, shape index: {}]
  %s3 = sld [smem:[#allocation0]]
  $region26: #{custom_loss.9} parent=0
    _
  %s5 = ssub.s32 1, %s3
  %s6 = scalar_select 0, %s5, %s3
  // Predicated region
  $region2: #{custom_loss.9} parent=0 // pred_check
    _
  $region3: #{custom_loss.9} parent=0 // pred_check_branch
    %8 = sbr.rel (0) target = $region5
  $region4: #{custom_loss.9} parent=0 // pred_region
    %s9 = sadd.s32 0, 0
    %p10 = scmp.lt.s32.totalorder %s9, 0
    %s11 = scalar_select %p10, %s9, 0
    %s12 = smul.addr %s11, 8
    %s13 = scalar_lea.vmem %s0, %s12
    %s14 = sadd.s32 0, 0
  $region5: #{custom_loss.9} parent=0 // pred_fallthru
    _
  // Predicated region
  $region6: #{custom_loss.9} parent=0 // pred_check
    _
  $region7: #{custom_loss.9} parent=0 // pred_check_branch
    %16 = sbr.rel (0) target = $region9
  $region8: #{custom_loss.9} parent=0 // pred_region
    %s17 = sadd.s32 0, 0
    %p18 = scmp.lt.s32.totalorder %s17, 0
    %s19 = scalar_select %p18, %s17, 0
    %s20 = smul.addr %s19, 8
    %s21 = scalar_lea.vmem %s1, %s20
    %s22 = sadd.s32 0, 0
  $region9: #{custom_loss.9} parent=0 // pred_fallthru
    _
  %s23 = sadd.s32 0, 0
  %p24 = scmp.lt.s32.totalorder %s23, 0
  %s25 = scalar_select %p24, %s23, 0
  %s26 = smul.addr %s25, 8
  %s27 = scalar_lea.vmem %s0, %s26
  %s28 = sadd.s32 0, 0
  %p29 = scmp.lt.s32.totalorder %s28, 0
  %s30 = scalar_select %p29, %s28, 0
  %s31 = smul.addr %s30, 8
  %s32 = scalar_lea.vmem %s1, %s31
  %s33 = sadd.s32 0, 0
  %p34 = scmp.lt.s32.totalorder %s33, 0
  %s35 = scalar_select %p34, %s33, 0
  %s36 = smul.addr %s35, 8
  %s37 = scalar_lea.vmem %s0, %s36
  %s38 = sadd.s32 0, 0
  %s39 = sadd.s32 0, 0
  %p40 = scmp.lt.s32.totalorder %s39, 0
  %s41 = scalar_select %p40, %s39, 0
  %s42 = smul.addr %s41, 8
  %s43 = scalar_lea.vmem %s1, %s42
  %s44 = sadd.s32 0, 0
  %p45 = scmp.eq.s32.totalorder 0, 0
  // Predicated region
  $region10: #{custom_loss.9} parent=0 // pred_check
    %p46 = pneg %p45
  $region11: #{custom_loss.9} parent=0 // pred_check_branch
    %48 = sbr.rel (%p46) target = $region13
  $region12: #{custom_loss.9} parent=0 // pred_region
    %49 = vst [vmem:[#allocation2] sm:$0xff] 0.0
  $region13: #{custom_loss.9} parent=0 // pred_fallthru
    _
  %v50 = vld [vmem:[%s37] sm:$0xff]
  %s51 = scalar_lea.vmem %s37, 8
  %v52 = vld [vmem:[%s51] sm:$0xff]
  %v53 = vmax.f32 %v50, %v52
  %s54 = scalar_lea.vmem %s37, 16
  %v55 = vld [vmem:[%s54] sm:$0xff]
  %v56 = vmax.f32 %v53, %v55
  %s57 = scalar_lea.vmem %s37, 24
  %v58 = vld [vmem:[%s57] sm:$0xff]
  %v59 = vmax.f32 %v56, %v58
  %v60 = vld [vmem:[#allocation2] sm:$0xff]
  %v61 = vld [vmem:[%s43] sm:$0xff]
  %s62 = scalar_lea.vmem %s43, 8
  %v63 = vld [vmem:[%s62] sm:$0xff]
  %v64 = vmax.f32 %v61, %v63
  %s65 = scalar_lea.vmem %s43, 16
  %v66 = vld [vmem:[%s65] sm:$0xff]
  %v67 = vmax.f32 %v64, %v66
  %s68 = scalar_lea.vmem %s43, 24
  %v69 = vld [vmem:[%s68] sm:$0xff]
  %v70 = vmax.f32 %v67, %v69
  %v71 = vsub.f32 %v59, %v70
  %v72 = vmul.f32 %v71, %v71
  %v73 = vadd.f32 %v60, %v72
  %74 = vst [vmem:[#allocation2] sm:$0xff] %v73
  // Predicated region
  $region14: #{custom_loss.9} parent=0 // pred_check
    %p75 = pneg %p45
  $region15: #{custom_loss.9} parent=0 // pred_check_branch
    %77 = sbr.rel (%p75) target = $region17
  $region16: #{custom_loss.9} parent=0 // pred_region
    %v78 = vld [vmem:[#allocation2] sm:$0xff]
    %v79 = vrot.slane %v78, 4
    %v80 = vadd.f32 %v78, %v79
    %v81 = vrot.slane %v80, 2
    %v82 = vadd.f32 %v80, %v81
    %v83 = vrot.slane %v82, 1
    %v84 = vadd.f32 %v82, %v83
    %85 = vst [vmem:[%s2] sm:$0x1] %v84
  $region17: #{custom_loss.9} parent=0 // pred_fallthru
    _
  // Predicated region
  $region18: #{custom_loss.9} parent=0 // pred_check
    _
  $region19: #{custom_loss.9} parent=0 // pred_check_branch
    %87 = sbr.rel (0) target = $region21
  $region20: #{custom_loss.9} parent=0 // pred_region
    _
  $region21: #{custom_loss.9} parent=0 // pred_fallthru
    _
  // Predicated region
  $region22: #{custom_loss.9} parent=0 // pred_check
    _
  $region23: #{custom_loss.9} parent=0 // pred_check_branch
    %89 = sbr.rel (0) target = $region25
  $region24: #{custom_loss.9} parent=0 // pred_region
    _
  $region25: #{custom_loss.9} parent=0 // pred_fallthru
    _

// kernel: custom_loss.7
$region0: #{custom_loss.7}
  #allocation0 [shape = 'u32[]', space=smem, size = 0x4, offset = 0x4, fixed_abs, tag = 'smem constant byte address 0x4 - core index']
  #allocation1 [shape = 'u32[144,128]{1,0:T(1,128)}', space=vmem, size = 0x12000, scoped, tag = 'internal scratch']
  #allocation2 [shape = 'f32[8,128]{1,0:T(8,128)}', space=vmem, size = 0x1000, scoped, tag = 'scratch operand']
  %s0 = inlined_call_operand.vmem [shape: f32[1,8,128], index: 0, kind: input, shape index: {}]
  %s1 = inlined_call_operand.vmem [shape: f32[1,8,128], index: 1, kind: input, shape index: {}]
  %s2 = inlined_call_operand.vmem [shape: f32[1,1,128], index: 2, kind: output, shape index: {}]
  %s3 = sld [smem:[#allocation0]]
  $region26: #{custom_loss.7} parent=0
    _
  %s5 = ssub.s32 1, %s3
  %s6 = scalar_select 0, %s5, %s3
  // Predicated region
  $region2: #{custom_loss.7} parent=0 // pred_check
    _
  $region3: #{custom_loss.7} parent=0 // pred_check_branch
    %8 = sbr.rel (0) target = $region5
  $region4: #{custom_loss.7} parent=0 // pred_region
    %s9 = sadd.s32 0, 0
    %p10 = scmp.lt.s32.totalorder %s9, 0
    %s11 = scalar_select %p10, %s9, 0
    %s12 = smul.addr %s11, 8
    %s13 = scalar_lea.vmem %s0, %s12
    %s14 = sadd.s32 0, 0
  $region5: #{custom_loss.7} parent=0 // pred_fallthru
    _
  // Predicated region
  $region6: #{custom_loss.7} parent=0 // pred_check
    _
  $region7: #{custom_loss.7} parent=0 // pred_check_branch
    %16 = sbr.rel (0) target = $region9
  $region8: #{custom_loss.7} parent=0 // pred_region
    %s17 = sadd.s32 0, 0
    %p18 = scmp.lt.s32.totalorder %s17, 0
    %s19 = scalar_select %p18, %s17, 0
    %s20 = smul.addr %s19, 8
    %s21 = scalar_lea.vmem %s1, %s20
    %s22 = sadd.s32 0, 0
  $region9: #{custom_loss.7} parent=0 // pred_fallthru
    _
  %s23 = sadd.s32 0, 0
  %p24 = scmp.lt.s32.totalorder %s23, 0
  %s25 = scalar_select %p24, %s23, 0
  %s26 = smul.addr %s25, 8
  %s27 = scalar_lea.vmem %s0, %s26
  %s28 = sadd.s32 0, 0
  %p29 = scmp.lt.s32.totalorder %s28, 0
  %s30 = scalar_select %p29, %s28, 0
  %s31 = smul.addr %s30, 8
  %s32 = scalar_lea.vmem %s1, %s31
  %s33 = sadd.s32 0, 0
  %p34 = scmp.lt.s32.totalorder %s33, 0
  %s35 = scalar_select %p34, %s33, 0
  %s36 = smul.addr %s35, 8
  %s37 = scalar_lea.vmem %s0, %s36
  %s38 = sadd.s32 0, 0
  %s39 = sadd.s32 0, 0
  %p40 = scmp.lt.s32.totalorder %s39, 0
  %s41 = scalar_select %p40, %s39, 0
  %s42 = smul.addr %s41, 8
  %s43 = scalar_lea.vmem %s1, %s42
  %s44 = sadd.s32 0, 0
  %p45 = scmp.eq.s32.totalorder 0, 0
  // Predicated region
  $region10: #{custom_loss.7} parent=0 // pred_check
    %p46 = pneg %p45
  $region11: #{custom_loss.7} parent=0 // pred_check_branch
    %48 = sbr.rel (%p46) target = $region13
  $region12: #{custom_loss.7} parent=0 // pred_region
    %49 = vst [vmem:[#allocation2] sm:$0xff] 0.0
  $region13: #{custom_loss.7} parent=0 // pred_fallthru
    _
  %v50 = vld [vmem:[%s37] sm:$0xff]
  %v51 = vld [vmem:[#allocation2] sm:$0xff]
  %v52 = vld [vmem:[%s43] sm:$0xff]
  %v53 = vsub.f32 %v50, %v52
  %v54 = vmul.f32 %v53, %v53
  %v55 = vadd.f32 %v51, %v54
  %56 = vst [vmem:[#allocation2] sm:$0xff] %v55
  // Predicated region
  $region14: #{custom_loss.7} parent=0 // pred_check
    %p57 = pneg %p45
  $region15: #{custom_loss.7} parent=0 // pred_check_branch
    %59 = sbr.rel (%p57) target = $region17
  $region16: #{custom_loss.7} parent=0 // pred_region
    %v60 = vld [vmem:[#allocation2] sm:$0xff]
    %v61 = vrot.slane %v60, 4
    %v62 = vadd.f32 %v60, %v61
    %v63 = vrot.slane %v62, 2
    %v64 = vadd.f32 %v62, %v63
    %v65 = vrot.slane %v64, 1
    %v66 = vadd.f32 %v64, %v65
    %67 = vst [vmem:[%s2] sm:$0x1] %v66
  $region17: #{custom_loss.7} parent=0 // pred_fallthru
    _
  // Predicated region
  $region18: #{custom_loss.7} parent=0 // pred_check
    _
  $region19: #{custom_loss.7} parent=0 // pred_check_branch
    %69 = sbr.rel (0) target = $region21
  $region20: #{custom_loss.7} parent=0 // pred_region
    _
  $region21: #{custom_loss.7} parent=0 // pred_fallthru
    _
  // Predicated region
  $region22: #{custom_loss.7} parent=0 // pred_check
    _
  $region23: #{custom_loss.7} parent=0 // pred_check_branch
    %71 = sbr.rel (0) target = $region25
  $region24: #{custom_loss.7} parent=0 // pred_region
    _
  $region25: #{custom_loss.7} parent=0 // pred_fallthru
    _

// kernel: custom_loss.11
$region0: #{custom_loss.11}
  #allocation0 [shape = 'u32[]', space=smem, size = 0x4, offset = 0x4, fixed_abs, tag = 'smem constant byte address 0x4 - core index']
  #allocation1 [shape = 'u32[144,128]{1,0:T(1,128)}', space=vmem, size = 0x12000, scoped, tag = 'internal scratch']
  #allocation2 [shape = 'f32[8,128]{1,0:T(8,128)}', space=vmem, size = 0x1000, scoped, tag = 'scratch operand']
  %s0 = inlined_call_operand.vmem [shape: f32[16,8,128], index: 0, kind: input, shape index: {}]
  %s1 = inlined_call_operand.vmem [shape: f32[16,8,128], index: 1, kind: input, shape index: {}]
  %s2 = inlined_call_operand.vmem [shape: f32[1,1,128], index: 2, kind: output, shape index: {}]
  %s3 = sld [smem:[#allocation0]]
  $region26: #{custom_loss.11} parent=0
    _
  %s5 = ssub.s32 1, %s3
  %s6 = scalar_select 0, %s5, %s3
  // Predicated region
  $region2: #{custom_loss.11} parent=0 // pred_check
    _
  $region3: #{custom_loss.11} parent=0 // pred_check_branch
    %8 = sbr.rel (0) target = $region5
  $region4: #{custom_loss.11} parent=0 // pred_region
    %s9 = sadd.s32 0, 0
    %p10 = scmp.lt.s32.totalorder %s9, 0
    %s11 = scalar_select %p10, %s9, 0
    %s12 = smul.addr %s11, 8
    %s13 = scalar_lea.vmem %s0, %s12
    %s14 = sadd.s32 0, 0
  $region5: #{custom_loss.11} parent=0 // pred_fallthru
    _
  // Predicated region
  $region6: #{custom_loss.11} parent=0 // pred_check
    _
  $region7: #{custom_loss.11} parent=0 // pred_check_branch
    %16 = sbr.rel (0) target = $region9
  $region8: #{custom_loss.11} parent=0 // pred_region
    %s17 = sadd.s32 0, 0
    %p18 = scmp.lt.s32.totalorder %s17, 0
    %s19 = scalar_select %p18, %s17, 0
    %s20 = smul.addr %s19, 8
    %s21 = scalar_lea.vmem %s1, %s20
    %s22 = sadd.s32 0, 0
  $region9: #{custom_loss.11} parent=0 // pred_fallthru
    _
  %s23 = sadd.s32 0, 0
  %p24 = scmp.lt.s32.totalorder %s23, 0
  %s25 = scalar_select %p24, %s23, 0
  %s26 = smul.addr %s25, 8
  %s27 = scalar_lea.vmem %s0, %s26
  %s28 = sadd.s32 0, 0
  %p29 = scmp.lt.s32.totalorder %s28, 0
  %s30 = scalar_select %p29, %s28, 0
  %s31 = smul.addr %s30, 8
  %s32 = scalar_lea.vmem %s1, %s31
  %s33 = sadd.s32 0, 0
  %p34 = scmp.lt.s32.totalorder %s33, 0
  %s35 = scalar_select %p34, %s33, 0
  %s36 = smul.addr %s35, 8
  %s37 = scalar_lea.vmem %s0, %s36
  %s38 = sadd.s32 0, 0
  %s39 = sadd.s32 0, 0
  %p40 = scmp.lt.s32.totalorder %s39, 0
  %s41 = scalar_select %p40, %s39, 0
  %s42 = smul.addr %s41, 8
  %s43 = scalar_lea.vmem %s1, %s42
  %s44 = sadd.s32 0, 0
  %p45 = scmp.eq.s32.totalorder 0, 0
  // Predicated region
  $region10: #{custom_loss.11} parent=0 // pred_check
    %p46 = pneg %p45
  $region11: #{custom_loss.11} parent=0 // pred_check_branch
    %48 = sbr.rel (%p46) target = $region13
  $region12: #{custom_loss.11} parent=0 // pred_region
    %49 = vst [vmem:[#allocation2] sm:$0xff] 0.0
  $region13: #{custom_loss.11} parent=0 // pred_fallthru
    _
  %v50 = vld [vmem:[%s37] sm:$0xff]
  %s51 = scalar_lea.vmem %s37, 8
  %v52 = vld [vmem:[%s51] sm:$0xff]
  %v53 = vmax.f32 %v50, %v52
  %s54 = scalar_lea.vmem %s37, 16
  %v55 = vld [vmem:[%s54] sm:$0xff]
  %v56 = vmax.f32 %v53, %v55
  %s57 = scalar_lea.vmem %s37, 24
  %v58 = vld [vmem:[%s57] sm:$0xff]
  %v59 = vmax.f32 %v56, %v58
  %s60 = scalar_lea.vmem %s37, 32
  %v61 = vld [vmem:[%s60] sm:$0xff]
  %v62 = vmax.f32 %v59, %v61
  %s63 = scalar_lea.vmem %s37, 40
  %v64 = vld [vmem:[%s63] sm:$0xff]
  %v65 = vmax.f32 %v62, %v64
  %s66 = scalar_lea.vmem %s37, 48
  %v67 = vld [vmem:[%s66] sm:$0xff]
  %v68 = vmax.f32 %v65, %v67
  %s69 = scalar_lea.vmem %s37, 56
  %v70 = vld [vmem:[%s69] sm:$0xff]
  %v71 = vmax.f32 %v68, %v70
  %s72 = scalar_lea.vmem %s37, 64
  %v73 = vld [vmem:[%s72] sm:$0xff]
  %v74 = vmax.f32 %v71, %v73
  %s75 = scalar_lea.vmem %s37, 72
  %v76 = vld [vmem:[%s75] sm:$0xff]
  %v77 = vmax.f32 %v74, %v76
  %s78 = scalar_lea.vmem %s37, 80
  %v79 = vld [vmem:[%s78] sm:$0xff]
  %v80 = vmax.f32 %v77, %v79
  %s81 = scalar_lea.vmem %s37, 88
  %v82 = vld [vmem:[%s81] sm:$0xff]
  %v83 = vmax.f32 %v80, %v82
  %s84 = scalar_lea.vmem %s37, 96
  %v85 = vld [vmem:[%s84] sm:$0xff]
  %v86 = vmax.f32 %v83, %v85
  %s87 = scalar_lea.vmem %s37, 104
  %v88 = vld [vmem:[%s87] sm:$0xff]
  %v89 = vmax.f32 %v86, %v88
  %s90 = scalar_lea.vmem %s37, 112
  %v91 = vld [vmem:[%s90] sm:$0xff]
  %v92 = vmax.f32 %v89, %v91
  %s93 = scalar_lea.vmem %s37, 120
  %v94 = vld [vmem:[%s93] sm:$0xff]
  %v95 = vmax.f32 %v92, %v94
  %v96 = vld [vmem:[#allocation2] sm:$0xff]
  %v97 = vld [vmem:[%s43] sm:$0xff]
  %s98 = scalar_lea.vmem %s43, 8
  %v99 = vld [vmem:[%s98] sm:$0xff]
  %v100 = vmax.f32 %v97, %v99
  %s101 = scalar_lea.vmem %s43, 16
  %v102 = vld [vmem:[%s101] sm:$0xff]
  %v103 = vmax.f32 %v100, %v102
  %s104 = scalar_lea.vmem %s43, 24
  %v105 = vld [vmem:[%s104] sm:$0xff]
  %v106 = vmax.f32 %v103, %v105
  %s107 = scalar_lea.vmem %s43, 32
  %v108 = vld [vmem:[%s107] sm:$0xff]
  %v109 = vmax.f32 %v106, %v108
  %s110 = scalar_lea.vmem %s43, 40
  %v111 = vld [vmem:[%s110] sm:$0xff]
  %v112 = vmax.f32 %v109, %v111
  %s113 = scalar_lea.vmem %s43, 48
  %v114 = vld [vmem:[%s113] sm:$0xff]
  %v115 = vmax.f32 %v112, %v114
  %s116 = scalar_lea.vmem %s43, 56
  %v117 = vld [vmem:[%s116] sm:$0xff]
  %v118 = vmax.f32 %v115, %v117
  %s119 = scalar_lea.vmem %s43, 64
  %v120 = vld [vmem:[%s119] sm:$0xff]
  %v121 = vmax.f32 %v118, %v120
  %s122 = scalar_lea.vmem %s43, 72
  %v123 = vld [vmem:[%s122] sm:$0xff]
  %v124 = vmax.f32 %v121, %v123
  %s125 = scalar_lea.vmem %s43, 80
  %v126 = vld [vmem:[%s125] sm:$0xff]
  %v127 = vmax.f32 %v124, %v126
  %s128 = scalar_lea.vmem %s43, 88
  %v129 = vld [vmem:[%s128] sm:$0xff]
  %v130 = vmax.f32 %v127, %v129
  %s131 = scalar_lea.vmem %s43, 96
  %v132 = vld [vmem:[%s131] sm:$0xff]
  %v133 = vmax.f32 %v130, %v132
  %s134 = scalar_lea.vmem %s43, 104
  %v135 = vld [vmem:[%s134] sm:$0xff]
  %v136 = vmax.f32 %v133, %v135
  %s137 = scalar_lea.vmem %s43, 112
  %v138 = vld [vmem:[%s137] sm:$0xff]
  %v139 = vmax.f32 %v136, %v138
  %s140 = scalar_lea.vmem %s43, 120
  %v141 = vld [vmem:[%s140] sm:$0xff]
  %v142 = vmax.f32 %v139, %v141
  %v143 = vsub.f32 %v95, %v142
  %v144 = vmul.f32 %v143, %v143
  %v145 = vadd.f32 %v96, %v144
  %146 = vst [vmem:[#allocation2] sm:$0xff] %v145
  // Predicated region
  $region14: #{custom_loss.11} parent=0 // pred_check
    %p147 = pneg %p45
  $region15: #{custom_loss.11} parent=0 // pred_check_branch
    %149 = sbr.rel (%p147) target = $region17
  $region16: #{custom_loss.11} parent=0 // pred_region
    %v150 = vld [vmem:[#allocation2] sm:$0xff]
    %v151 = vrot.slane %v150, 4
    %v152 = vadd.f32 %v150, %v151
    %v153 = vrot.slane %v152, 2
    %v154 = vadd.f32 %v152, %v153
    %v155 = vrot.slane %v154, 1
    %v156 = vadd.f32 %v154, %v155
    %157 = vst [vmem:[%s2] sm:$0x1] %v156
  $region17: #{custom_loss.11} parent=0 // pred_fallthru
    _
  // Predicated region
  $region18: #{custom_loss.11} parent=0 // pred_check
    _
  $region19: #{custom_loss.11} parent=0 // pred_check_branch
    %159 = sbr.rel (0) target = $region21
  $region20: #{custom_loss.11} parent=0 // pred_region
    _
  $region21: #{custom_loss.11} parent=0 // pred_fallthru
    _
  // Predicated region
  $region22: #{custom_loss.11} parent=0 // pred_check
    _
  $region23: #{custom_loss.11} parent=0 // pred_check_branch
    %161 = sbr.rel (0) target = $region25
  $region24: #{custom_loss.11} parent=0 // pred_region
    _
  $region25: #{custom_loss.11} parent=0 // pred_fallthru
    _

</llo_original>
